<compile_context>
chip_gen: v6e
topology: v6e:2x2x1
jax: 0.10.0
libtpu: 0.0.40
codegen_flags: <defaults>
</compile_context>

<pallas_src>
import math

import jax
import jax.numpy as jnp
from jax.experimental import pallas as pl
from jax.experimental.pallas import tpu as pltpu

# --- module-level hyperparameters (globals in the PyTorch reference) -------------
d_model = 32
d_k = 8
d_v = 8
n_heads = 4


# ---------------------------------------------------------------------------------
# Fused kernel: one grid point == one batch element; all heads handled in-body.
# ---------------------------------------------------------------------------------
def _mha_fused_kernel(
    q_in_ref, k_in_ref, v_in_ref, bias_ref,
    wq_ref, bq_ref, wk_ref, bk_ref, wv_ref, bv_ref,
    wo_ref, bo_ref, gamma_ref, beta_ref,
    out_ref, attn_ref,
):
    inv_sqrt_dk = jnp.float32(1.0 / math.sqrt(d_k))

    # Q/K/V projections (f32 MXU accumulation). Fold 1/sqrt(d_k) into q once
    # (one [Lq, H*d_k] multiply) instead of scaling every [Lq, Lk] score block.
    q = (jnp.dot(q_in_ref[...], wq_ref[...], preferred_element_type=jnp.float32)
         + bq_ref[...]) * inv_sqrt_dk
    k = jnp.dot(k_in_ref[...], wk_ref[...],
                preferred_element_type=jnp.float32) + bk_ref[...]
    v = jnp.dot(v_in_ref[...], wv_ref[...],
                preferred_element_type=jnp.float32) + bv_ref[...]

    bias = bias_ref[...]          # [Lq, Lk] additive mask bias (0 or -1e9), f32
    wo = wo_ref[...]              # [H*d_v, d_model]

    # Output projection accumulated head-by-head:
    #   ctx @ wo == sum_h ctx_h @ wo[h*d_v:(h+1)*d_v, :]
    proj = jnp.broadcast_to(bo_ref[...], out_ref.shape).astype(jnp.float32)

    # Per-head attention, statically unrolled (n_heads == 4); static lane
    # slices instead of in-kernel reshape/transpose.
    for h in range(n_heads):
        q_h = q[:, h * d_k:(h + 1) * d_k]          # [Lq, d_k]
        k_h = k[:, h * d_k:(h + 1) * d_k]          # [Lk, d_k]
        v_h = v[:, h * d_v:(h + 1) * d_v]          # [Lk, d_v]

        # Contract the last dims of q and k directly (no explicit transpose).
        s = jax.lax.dot_general(
            q_h, k_h, (((1,), (1,)), ((), ())),
            preferred_element_type=jnp.float32,
        ) + bias                                    # [Lq, Lk]

        # numerically stable softmax along the key axis
        s = s - jnp.max(s, axis=-1, keepdims=True)
        e = jnp.exp(s)
        a = e * pl.reciprocal(jnp.sum(e, axis=-1, keepdims=True))

        attn_ref[h] = a                             # [Lq, Lk]

        ctx_h = jnp.dot(a, v_h, preferred_element_type=jnp.float32)  # [Lq, d_v]
        proj = proj + jnp.dot(ctx_h, wo[h * d_v:(h + 1) * d_v, :],
                              preferred_element_type=jnp.float32)

    # Residual + LayerNorm, still inside the same kernel.
    x = proj + q_in_ref[...]                        # residual is the Q input
    mean = jnp.mean(x, axis=-1, keepdims=True)
    var = jnp.mean((x - mean) ** 2, axis=-1, keepdims=True)
    y = (x - mean) * jax.lax.rsqrt(var + jnp.float32(1e-5))
    out_ref[...] = y * gamma_ref[...] + beta_ref[...]


# ---------------------------------------------------------------------------------
# Wrapper: full MultiHeadAttention forward in one pallas_call
# ---------------------------------------------------------------------------------
def multi_head_attention(Q, K, V, attn_mask, params):
    B, Lq, _ = Q.shape
    Lk = K.shape[1]

    # Precompute the additive mask bias once outside (tiny elementwise op).
    mask_bias = jnp.where(attn_mask, jnp.float32(-1e9), jnp.float32(0.0))

    def whole(shape):
        return pl.BlockSpec(shape, lambda b: (0,) * len(shape))

    out, attn = pl.pallas_call(
        _mha_fused_kernel,
        out_shape=(
            jax.ShapeDtypeStruct((B, Lq, d_model), jnp.float32),
            jax.ShapeDtypeStruct((B, n_heads, Lq, Lk), jnp.float32),
        ),
        grid=(B,),
        in_specs=[
            pl.BlockSpec((pl.Squeezed(), Lq, d_model), lambda b: (b, 0, 0)),  # Q
            pl.BlockSpec((pl.Squeezed(), Lk, d_model), lambda b: (b, 0, 0)),  # K
            pl.BlockSpec((pl.Squeezed(), Lk, d_model), lambda b: (b, 0, 0)),  # V
            pl.BlockSpec((pl.Squeezed(), Lq, Lk), lambda b: (b, 0, 0)),       # mask bias
            whole((d_model, n_heads * d_k)),   # wq
            whole((1, n_heads * d_k)),         # bq
            whole((d_model, n_heads * d_k)),   # wk
            whole((1, n_heads * d_k)),         # bk
            whole((d_model, n_heads * d_v)),   # wv
            whole((1, n_heads * d_v)),         # bv
            whole((n_heads * d_v, d_model)),   # wo
            whole((1, d_model)),               # bo
            whole((1, d_model)),               # gamma
            whole((1, d_model)),               # beta
        ],
        out_specs=(
            pl.BlockSpec((pl.Squeezed(), Lq, d_model), lambda b: (b, 0, 0)),
            pl.BlockSpec((pl.Squeezed(), n_heads, Lq, Lk), lambda b: (b, 0, 0, 0)),
        ),
        compiler_params=pltpu.CompilerParams(
            dimension_semantics=("parallel",)   # batch rows shard across TCs (v7x)
        ),
    )(
        Q, K, V, mask_bias,
        params["wq"], params["bq"].reshape(1, -1),
        params["wk"], params["bk"].reshape(1, -1),
        params["wv"], params["bv"].reshape(1, -1),
        params["wo"], params["bo"].reshape(1, -1),
        params["gamma"].reshape(1, -1), params["beta"].reshape(1, -1),
    )
    return out, attn


# ---------------------------------------------------------------------------------
# Deterministic parameter init (mirrors nn.Linear / nn.LayerNorm shapes)
# ---------------------------------------------------------------------------------
def init_params(key):
    def lin(k, d_in, d_out):
        kw, kb = jax.random.split(k)
        bound = 1.0 / math.sqrt(d_in)
        w = jax.random.uniform(kw, (d_out, d_in), jnp.float32, -bound, bound)
        b = jax.random.uniform(kb, (d_out,), jnp.float32, -bound, bound)
        return w.T, b  # stored as [d_in, d_out] so the kernel computes x @ w + b

    k0, k1, k2, k3 = jax.random.split(key, 4)
    wq, bq = lin(k0, d_model, d_k * n_heads)
    wk, bk = lin(k1, d_model, d_k * n_heads)
    wv, bv = lin(k2, d_model, d_v * n_heads)
    wo, bo = lin(k3, n_heads * d_v, d_model)
    return dict(
        wq=wq, bq=bq, wk=wk, bk=bk, wv=wv, bv=bv, wo=wo, bo=bo,
        gamma=jnp.ones((d_model,), jnp.float32),
        beta=jnp.zeros((d_model,), jnp.float32),
    )


# ---------------------------------------------------------------------------------
# Pure-JAX reference for a sanity check
# ---------------------------------------------------------------------------------
def reference(Q, K, V, attn_mask, p):
    B, Lq, _ = Q.shape
    q = (Q @ p["wq"] + p["bq"]).reshape(B, Lq, n_heads, d_k).transpose(0, 2, 1, 3)
    k = (K @ p["wk"] + p["bk"]).reshape(B, -1, n_heads, d_k).transpose(0, 2, 1, 3)
    v = (V @ p["wv"] + p["bv"]).reshape(B, -1, n_heads, d_v).transpose(0, 2, 1, 3)
    s = jnp.einsum("bhqd,bhkd->bhqk", q, k) / math.sqrt(d_k)
    s = jnp.where(attn_mask[:, None, :, :], -1e9, s)
    a = jax.nn.softmax(s, axis=-1)
    c = jnp.einsum("bhqk,bhkd->bhqd", a, v)
    c = c.transpose(0, 2, 1, 3).reshape(B, Lq, n_heads * d_v)
    o = c @ p["wo"] + p["bo"] + Q
    mu = o.mean(-1, keepdims=True)
    var = ((o - mu) ** 2).mean(-1, keepdims=True)
    return (o - mu) / jnp.sqrt(var + 1e-5) * p["gamma"] + p["beta"], a


if __name__ == "__main__":
    key = jax.random.PRNGKey(0)
    kq, kk, kv, kp = jax.random.split(key, 4)

    B, L = 2, 8
    Q = jax.random.normal(kq, (B, L, d_model), jnp.float32)
    K = jax.random.normal(kk, (B, L, d_model), jnp.float32)
    V = jax.random.normal(kv, (B, L, d_model), jnp.float32)

    # padding-style boolean mask: batch 1 masks its last two key positions
    attn_mask = jnp.zeros((B, L, L), dtype=jnp.bool_).at[1, :, L - 2:].set(True)

    params = init_params(kp)

    out, attn = multi_head_attention(Q, K, V, attn_mask, params)
    out, attn = jax.block_until_ready((out, attn))

    ref_out, ref_attn = reference(Q, K, V, attn_mask, params)
    assert out.shape == (B, L, d_model)
    assert attn.shape == (B, n_heads, L, L)
    assert jnp.allclose(out, ref_out, atol=1e-4, rtol=1e-4)
    assert jnp.allclose(attn, ref_attn, atol=1e-4, rtol=1e-4)

    print("KERNEL_OK")
</pallas_src>

<mosaic_0001>
module attributes {stable_mosaic.version = 11 : i64} {
  func.func @_mha_fused_kernel(%arg0: i32, %arg1: memref<1x8x32xf32, #tpu.memory_space<vmem>>, %arg2: memref<1x8x32xf32, #tpu.memory_space<vmem>>, %arg3: memref<1x8x32xf32, #tpu.memory_space<vmem>>, %arg4: memref<1x8x8xf32, #tpu.memory_space<vmem>>, %arg5: memref<32x32xf32, #tpu.memory_space<vmem>>, %arg6: memref<1x32xf32, #tpu.memory_space<vmem>>, %arg7: memref<32x32xf32, #tpu.memory_space<vmem>>, %arg8: memref<1x32xf32, #tpu.memory_space<vmem>>, %arg9: memref<32x32xf32, #tpu.memory_space<vmem>>, %arg10: memref<1x32xf32, #tpu.memory_space<vmem>>, %arg11: memref<32x32xf32, #tpu.memory_space<vmem>>, %arg12: memref<1x32xf32, #tpu.memory_space<vmem>>, %arg13: memref<1x32xf32, #tpu.memory_space<vmem>>, %arg14: memref<1x32xf32, #tpu.memory_space<vmem>>, %arg15: memref<1x8x32xf32, #tpu.memory_space<vmem>>, %arg16: memref<1x4x8x8xf32, #tpu.memory_space<vmem>>) attributes {dimension_semantics = [#tpu.dimension_semantics<parallel>], iteration_bounds = array<i64: 2>, scalar_prefetch = 0 : i64, scratch_operands = 0 : i64, tpu.core_type = #tpu.core_type<tc>, window_params = [{transform_indices = @transform_0, window_bounds = array<i64: 1, 8, 32>}, {transform_indices = @transform_1, window_bounds = array<i64: 1, 8, 32>}, {transform_indices = @transform_2, window_bounds = array<i64: 1, 8, 32>}, {transform_indices = @transform_3, window_bounds = array<i64: 1, 8, 8>}, {pipeline_mode = #tpu.pipeline_mode<synchronous>, transform_indices = @transform_4, window_bounds = array<i64: 32, 32>}, {pipeline_mode = #tpu.pipeline_mode<synchronous>, transform_indices = @transform_5, window_bounds = array<i64: 1, 32>}, {pipeline_mode = #tpu.pipeline_mode<synchronous>, transform_indices = @transform_6, window_bounds = array<i64: 32, 32>}, {pipeline_mode = #tpu.pipeline_mode<synchronous>, transform_indices = @transform_7, window_bounds = array<i64: 1, 32>}, {pipeline_mode = #tpu.pipeline_mode<synchronous>, transform_indices = @transform_8, window_bounds = array<i64: 32, 32>}, {pipeline_mode = #tpu.pipeline_mode<synchronous>, transform_indices = @transform_9, window_bounds = array<i64: 1, 32>}, {pipeline_mode = #tpu.pipeline_mode<synchronous>, transform_indices = @transform_10, window_bounds = array<i64: 32, 32>}, {pipeline_mode = #tpu.pipeline_mode<synchronous>, transform_indices = @transform_11, window_bounds = array<i64: 1, 32>}, {pipeline_mode = #tpu.pipeline_mode<synchronous>, transform_indices = @transform_12, window_bounds = array<i64: 1, 32>}, {pipeline_mode = #tpu.pipeline_mode<synchronous>, transform_indices = @transform_13, window_bounds = array<i64: 1, 32>}, {transform_indices = @transform_14, window_bounds = array<i64: 1, 8, 32>}, {transform_indices = @transform_15, window_bounds = array<i64: 1, 4, 8, 8>}]} {
    %c0 = arith.constant 0 : index
    %c0_0 = arith.constant 0 : index
    %c0_1 = arith.constant 0 : index
    %0 = vector.load %arg1[%c0, %c0_0, %c0_1] : memref<1x8x32xf32, #tpu.memory_space<vmem>>, vector<1x8x32xf32>
    %1 = vector.shape_cast %0 : vector<1x8x32xf32> to vector<8x32xf32>
    %c0_2 = arith.constant 0 : index
    %c0_3 = arith.constant 0 : index
    %2 = vector.load %arg5[%c0_2, %c0_3] : memref<32x32xf32, #tpu.memory_space<vmem>>, vector<32x32xf32>
    %cst = arith.constant dense<0.000000e+00> : vector<8x32xf32>
    %3 = tpu.matmul %1, %2, %cst {dimension_numbers = #tpu.dot_dimension_numbers<[1], [0], [0], [1], [0, 0, 1, 1], [], []>} : vector<8x32xf32>, vector<32x32xf32>, vector<8x32xf32> -> vector<8x32xf32>
    %c0_4 = arith.constant 0 : index
    %c0_5 = arith.constant 0 : index
    %4 = vector.load %arg6[%c0_4, %c0_5] : memref<1x32xf32, #tpu.memory_space<vmem>>, vector<1x32xf32>
    %5 = vector.broadcast %4 : vector<1x32xf32> to vector<8x32xf32>
    %6 = arith.addf %3, %5 : vector<8x32xf32>
    %cst_6 = arith.constant 0.353553385 : f32
    %7 = vector.broadcast %cst_6 : f32 to vector<8x32xf32>
    %8 = arith.mulf %6, %7 : vector<8x32xf32>
    %c0_7 = arith.constant 0 : index
    %c0_8 = arith.constant 0 : index
    %c0_9 = arith.constant 0 : index
    %9 = vector.load %arg2[%c0_7, %c0_8, %c0_9] : memref<1x8x32xf32, #tpu.memory_space<vmem>>, vector<1x8x32xf32>
    %10 = vector.shape_cast %9 : vector<1x8x32xf32> to vector<8x32xf32>
    %c0_10 = arith.constant 0 : index
    %c0_11 = arith.constant 0 : index
    %11 = vector.load %arg7[%c0_10, %c0_11] : memref<32x32xf32, #tpu.memory_space<vmem>>, vector<32x32xf32>
    %cst_12 = arith.constant dense<0.000000e+00> : vector<8x32xf32>
    %12 = tpu.matmul %10, %11, %cst_12 {dimension_numbers = #tpu.dot_dimension_numbers<[1], [0], [0], [1], [0, 0, 1, 1], [], []>} : vector<8x32xf32>, vector<32x32xf32>, vector<8x32xf32> -> vector<8x32xf32>
    %c0_13 = arith.constant 0 : index
    %c0_14 = arith.constant 0 : index
    %13 = vector.load %arg8[%c0_13, %c0_14] : memref<1x32xf32, #tpu.memory_space<vmem>>, vector<1x32xf32>
    %14 = vector.broadcast %13 : vector<1x32xf32> to vector<8x32xf32>
    %15 = arith.addf %12, %14 : vector<8x32xf32>
    %c0_15 = arith.constant 0 : index
    %c0_16 = arith.constant 0 : index
    %c0_17 = arith.constant 0 : index
    %16 = vector.load %arg3[%c0_15, %c0_16, %c0_17] : memref<1x8x32xf32, #tpu.memory_space<vmem>>, vector<1x8x32xf32>
    %17 = vector.shape_cast %16 : vector<1x8x32xf32> to vector<8x32xf32>
    %c0_18 = arith.constant 0 : index
    %c0_19 = arith.constant 0 : index
    %18 = vector.load %arg9[%c0_18, %c0_19] : memref<32x32xf32, #tpu.memory_space<vmem>>, vector<32x32xf32>
    %cst_20 = arith.constant dense<0.000000e+00> : vector<8x32xf32>
    %19 = tpu.matmul %17, %18, %cst_20 {dimension_numbers = #tpu.dot_dimension_numbers<[1], [0], [0], [1], [0, 0, 1, 1], [], []>} : vector<8x32xf32>, vector<32x32xf32>, vector<8x32xf32> -> vector<8x32xf32>
    %c0_21 = arith.constant 0 : index
    %c0_22 = arith.constant 0 : index
    %20 = vector.load %arg10[%c0_21, %c0_22] : memref<1x32xf32, #tpu.memory_space<vmem>>, vector<1x32xf32>
    %21 = vector.broadcast %20 : vector<1x32xf32> to vector<8x32xf32>
    %22 = arith.addf %19, %21 : vector<8x32xf32>
    %c0_23 = arith.constant 0 : index
    %c0_24 = arith.constant 0 : index
    %c0_25 = arith.constant 0 : index
    %23 = vector.load %arg4[%c0_23, %c0_24, %c0_25] : memref<1x8x8xf32, #tpu.memory_space<vmem>>, vector<1x8x8xf32>
    %24 = vector.shape_cast %23 : vector<1x8x8xf32> to vector<8x8xf32>
    %c0_26 = arith.constant 0 : index
    %c0_27 = arith.constant 0 : index
    %25 = vector.load %arg11[%c0_26, %c0_27] : memref<32x32xf32, #tpu.memory_space<vmem>>, vector<32x32xf32>
    %c0_28 = arith.constant 0 : index
    %c0_29 = arith.constant 0 : index
    %26 = vector.load %arg12[%c0_28, %c0_29] : memref<1x32xf32, #tpu.memory_space<vmem>>, vector<1x32xf32>
    %27 = vector.shape_cast %26 : vector<1x32xf32> to vector<1x32xf32>
    %28 = vector.broadcast %27 : vector<1x32xf32> to vector<8x32xf32>
    %29 = vector.extract_strided_slice %8 {offsets = [0, 0], sizes = [8, 8], strides = [1, 1]} : vector<8x32xf32> to vector<8x8xf32>
    %30 = vector.extract_strided_slice %15 {offsets = [0, 0], sizes = [8, 8], strides = [1, 1]} : vector<8x32xf32> to vector<8x8xf32>
    %31 = vector.extract_strided_slice %22 {offsets = [0, 0], sizes = [8, 8], strides = [1, 1]} : vector<8x32xf32> to vector<8x8xf32>
    %cst_30 = arith.constant dense<0.000000e+00> : vector<8x8xf32>
    %32 = tpu.matmul %29, %30, %cst_30 {dimension_numbers = #tpu.dot_dimension_numbers<[1], [1], [0], [0], [0, 0, 1, 0], [], []>} : vector<8x8xf32>, vector<8x8xf32>, vector<8x8xf32> -> vector<8x8xf32>
    %33 = arith.addf %32, %24 : vector<8x8xf32>
    %cst_31 = arith.constant dense<0xFF800000> : vector<8xf32>
    %34 = vector.multi_reduction <maximumf>, %33, %cst_31 [1] : vector<8x8xf32> to vector<8xf32>
    %35 = vector.shape_cast %34 : vector<8xf32> to vector<8x1xf32>
    %36 = vector.broadcast %35 : vector<8x1xf32> to vector<8x8xf32>
    %37 = arith.subf %33, %36 : vector<8x8xf32>
    %38 = math.exp %37 : vector<8x8xf32>
    %cst_32 = arith.constant dense<0.000000e+00> : vector<8xf32>
    %39 = vector.multi_reduction <add>, %38, %cst_32 [1] : vector<8x8xf32> to vector<8xf32>
    %40 = vector.shape_cast %39 : vector<8xf32> to vector<8x1xf32>
    %41 = tpu.reciprocal %40 : vector<8x1xf32> -> vector<8x1xf32>
    %42 = vector.broadcast %41 : vector<8x1xf32> to vector<8x8xf32>
    %43 = arith.mulf %38, %42 : vector<8x8xf32>
    %c0_33 = arith.constant 0 : index
    %c0_34 = arith.constant 0 : index
    %c0_35 = arith.constant 0 : index
    %c0_36 = arith.constant 0 : index
    %44 = vector.load %arg16[%c0_33, %c0_34, %c0_35, %c0_36] : memref<1x4x8x8xf32, #tpu.memory_space<vmem>>, vector<1x1x8x8xf32>
    %45 = vector.shape_cast %44 : vector<1x1x8x8xf32> to vector<8x8xf32>
    %46 = vector.shape_cast %43 : vector<8x8xf32> to vector<1x1x8x8xf32>
    tpu.vector_store %arg16[%c0_33, %c0_34, %c0_35, %c0_36], %46 {strides = array<i32>} : memref<1x4x8x8xf32, #tpu.memory_space<vmem>>, vector<1x1x8x8xf32>,
    %cst_37 = arith.constant dense<0.000000e+00> : vector<8x8xf32>
    %47 = tpu.matmul %43, %31, %cst_37 {dimension_numbers = #tpu.dot_dimension_numbers<[1], [0], [0], [1], [0, 0, 1, 1], [], []>} : vector<8x8xf32>, vector<8x8xf32>, vector<8x8xf32> -> vector<8x8xf32>
    %48 = vector.extract_strided_slice %25 {offsets = [0, 0], sizes = [8, 32], strides = [1, 1]} : vector<32x32xf32> to vector<8x32xf32>
    %cst_38 = arith.constant dense<0.000000e+00> : vector<8x32xf32>
    %49 = tpu.matmul %47, %48, %cst_38 {dimension_numbers = #tpu.dot_dimension_numbers<[1], [0], [0], [1], [0, 0, 1, 1], [], []>} : vector<8x8xf32>, vector<8x32xf32>, vector<8x32xf32> -> vector<8x32xf32>
    %50 = arith.addf %28, %49 : vector<8x32xf32>
    %51 = vector.extract_strided_slice %8 {offsets = [0, 8], sizes = [8, 8], strides = [1, 1]} : vector<8x32xf32> to vector<8x8xf32>
    %52 = vector.extract_strided_slice %15 {offsets = [0, 8], sizes = [8, 8], strides = [1, 1]} : vector<8x32xf32> to vector<8x8xf32>
    %53 = vector.extract_strided_slice %22 {offsets = [0, 8], sizes = [8, 8], strides = [1, 1]} : vector<8x32xf32> to vector<8x8xf32>
    %cst_39 = arith.constant dense<0.000000e+00> : vector<8x8xf32>
    %54 = tpu.matmul %51, %52, %cst_39 {dimension_numbers = #tpu.dot_dimension_numbers<[1], [1], [0], [0], [0, 0, 1, 0], [], []>} : vector<8x8xf32>, vector<8x8xf32>, vector<8x8xf32> -> vector<8x8xf32>
    %55 = arith.addf %54, %24 : vector<8x8xf32>
    %cst_40 = arith.constant dense<0xFF800000> : vector<8xf32>
    %56 = vector.multi_reduction <maximumf>, %55, %cst_40 [1] : vector<8x8xf32> to vector<8xf32>
    %57 = vector.shape_cast %56 : vector<8xf32> to vector<8x1xf32>
    %58 = vector.broadcast %57 : vector<8x1xf32> to vector<8x8xf32>
    %59 = arith.subf %55, %58 : vector<8x8xf32>
    %60 = math.exp %59 : vector<8x8xf32>
    %cst_41 = arith.constant dense<0.000000e+00> : vector<8xf32>
    %61 = vector.multi_reduction <add>, %60, %cst_41 [1] : vector<8x8xf32> to vector<8xf32>
    %62 = vector.shape_cast %61 : vector<8xf32> to vector<8x1xf32>
    %63 = tpu.reciprocal %62 : vector<8x1xf32> -> vector<8x1xf32>
    %64 = vector.broadcast %63 : vector<8x1xf32> to vector<8x8xf32>
    %65 = arith.mulf %60, %64 : vector<8x8xf32>
    %c0_42 = arith.constant 0 : index
    %c1 = arith.constant 1 : index
    %c0_43 = arith.constant 0 : index
    %c0_44 = arith.constant 0 : index
    %66 = vector.load %arg16[%c0_42, %c1, %c0_43, %c0_44] : memref<1x4x8x8xf32, #tpu.memory_space<vmem>>, vector<1x1x8x8xf32>
    %67 = vector.shape_cast %66 : vector<1x1x8x8xf32> to vector<8x8xf32>
    %68 = vector.shape_cast %65 : vector<8x8xf32> to vector<1x1x8x8xf32>
    tpu.vector_store %arg16[%c0_42, %c1, %c0_43, %c0_44], %68 {strides = array<i32>} : memref<1x4x8x8xf32, #tpu.memory_space<vmem>>, vector<1x1x8x8xf32>,
    %cst_45 = arith.constant dense<0.000000e+00> : vector<8x8xf32>
    %69 = tpu.matmul %65, %53, %cst_45 {dimension_numbers = #tpu.dot_dimension_numbers<[1], [0], [0], [1], [0, 0, 1, 1], [], []>} : vector<8x8xf32>, vector<8x8xf32>, vector<8x8xf32> -> vector<8x8xf32>
    %70 = vector.extract_strided_slice %25 {offsets = [8, 0], sizes = [8, 32], strides = [1, 1]} : vector<32x32xf32> to vector<8x32xf32>
    %cst_46 = arith.constant dense<0.000000e+00> : vector<8x32xf32>
    %71 = tpu.matmul %69, %70, %cst_46 {dimension_numbers = #tpu.dot_dimension_numbers<[1], [0], [0], [1], [0, 0, 1, 1], [], []>} : vector<8x8xf32>, vector<8x32xf32>, vector<8x32xf32> -> vector<8x32xf32>
    %72 = arith.addf %50, %71 : vector<8x32xf32>
    %73 = vector.extract_strided_slice %8 {offsets = [0, 16], sizes = [8, 8], strides = [1, 1]} : vector<8x32xf32> to vector<8x8xf32>
    %74 = vector.extract_strided_slice %15 {offsets = [0, 16], sizes = [8, 8], strides = [1, 1]} : vector<8x32xf32> to vector<8x8xf32>
    %75 = vector.extract_strided_slice %22 {offsets = [0, 16], sizes = [8, 8], strides = [1, 1]} : vector<8x32xf32> to vector<8x8xf32>
    %cst_47 = arith.constant dense<0.000000e+00> : vector<8x8xf32>
    %76 = tpu.matmul %73, %74, %cst_47 {dimension_numbers = #tpu.dot_dimension_numbers<[1], [1], [0], [0], [0, 0, 1, 0], [], []>} : vector<8x8xf32>, vector<8x8xf32>, vector<8x8xf32> -> vector<8x8xf32>
    %77 = arith.addf %76, %24 : vector<8x8xf32>
    %cst_48 = arith.constant dense<0xFF800000> : vector<8xf32>
    %78 = vector.multi_reduction <maximumf>, %77, %cst_48 [1] : vector<8x8xf32> to vector<8xf32>
    %79 = vector.shape_cast %78 : vector<8xf32> to vector<8x1xf32>
    %80 = vector.broadcast %79 : vector<8x1xf32> to vector<8x8xf32>
    %81 = arith.subf %77, %80 : vector<8x8xf32>
    %82 = math.exp %81 : vector<8x8xf32>
    %cst_49 = arith.constant dense<0.000000e+00> : vector<8xf32>
    %83 = vector.multi_reduction <add>, %82, %cst_49 [1] : vector<8x8xf32> to vector<8xf32>
    %84 = vector.shape_cast %83 : vector<8xf32> to vector<8x1xf32>
    %85 = tpu.reciprocal %84 : vector<8x1xf32> -> vector<8x1xf32>
    %86 = vector.broadcast %85 : vector<8x1xf32> to vector<8x8xf32>
    %87 = arith.mulf %82, %86 : vector<8x8xf32>
    %c0_50 = arith.constant 0 : index
    %c2 = arith.constant 2 : index
    %c0_51 = arith.constant 0 : index
    %c0_52 = arith.constant 0 : index
    %88 = vector.load %arg16[%c0_50, %c2, %c0_51, %c0_52] : memref<1x4x8x8xf32, #tpu.memory_space<vmem>>, vector<1x1x8x8xf32>
    %89 = vector.shape_cast %88 : vector<1x1x8x8xf32> to vector<8x8xf32>
    %90 = vector.shape_cast %87 : vector<8x8xf32> to vector<1x1x8x8xf32>
    tpu.vector_store %arg16[%c0_50, %c2, %c0_51, %c0_52], %90 {strides = array<i32>} : memref<1x4x8x8xf32, #tpu.memory_space<vmem>>, vector<1x1x8x8xf32>,
    %cst_53 = arith.constant dense<0.000000e+00> : vector<8x8xf32>
    %91 = tpu.matmul %87, %75, %cst_53 {dimension_numbers = #tpu.dot_dimension_numbers<[1], [0], [0], [1], [0, 0, 1, 1], [], []>} : vector<8x8xf32>, vector<8x8xf32>, vector<8x8xf32> -> vector<8x8xf32>
    %92 = vector.extract_strided_slice %25 {offsets = [16, 0], sizes = [8, 32], strides = [1, 1]} : vector<32x32xf32> to vector<8x32xf32>
    %cst_54 = arith.constant dense<0.000000e+00> : vector<8x32xf32>
    %93 = tpu.matmul %91, %92, %cst_54 {dimension_numbers = #tpu.dot_dimension_numbers<[1], [0], [0], [1], [0, 0, 1, 1], [], []>} : vector<8x8xf32>, vector<8x32xf32>, vector<8x32xf32> -> vector<8x32xf32>
    %94 = arith.addf %72, %93 : vector<8x32xf32>
    %95 = vector.extract_strided_slice %8 {offsets = [0, 24], sizes = [8, 8], strides = [1, 1]} : vector<8x32xf32> to vector<8x8xf32>
    %96 = vector.extract_strided_slice %15 {offsets = [0, 24], sizes = [8, 8], strides = [1, 1]} : vector<8x32xf32> to vector<8x8xf32>
    %97 = vector.extract_strided_slice %22 {offsets = [0, 24], sizes = [8, 8], strides = [1, 1]} : vector<8x32xf32> to vector<8x8xf32>
    %cst_55 = arith.constant dense<0.000000e+00> : vector<8x8xf32>
    %98 = tpu.matmul %95, %96, %cst_55 {dimension_numbers = #tpu.dot_dimension_numbers<[1], [1], [0], [0], [0, 0, 1, 0], [], []>} : vector<8x8xf32>, vector<8x8xf32>, vector<8x8xf32> -> vector<8x8xf32>
    %99 = arith.addf %98, %24 : vector<8x8xf32>
    %cst_56 = arith.constant dense<0xFF800000> : vector<8xf32>
    %100 = vector.multi_reduction <maximumf>, %99, %cst_56 [1] : vector<8x8xf32> to vector<8xf32>
    %101 = vector.shape_cast %100 : vector<8xf32> to vector<8x1xf32>
    %102 = vector.broadcast %101 : vector<8x1xf32> to vector<8x8xf32>
    %103 = arith.subf %99, %102 : vector<8x8xf32>
    %104 = math.exp %103 : vector<8x8xf32>
    %cst_57 = arith.constant dense<0.000000e+00> : vector<8xf32>
    %105 = vector.multi_reduction <add>, %104, %cst_57 [1] : vector<8x8xf32> to vector<8xf32>
    %106 = vector.shape_cast %105 : vector<8xf32> to vector<8x1xf32>
    %107 = tpu.reciprocal %106 : vector<8x1xf32> -> vector<8x1xf32>
    %108 = vector.broadcast %107 : vector<8x1xf32> to vector<8x8xf32>
    %109 = arith.mulf %104, %108 : vector<8x8xf32>
    %c0_58 = arith.constant 0 : index
    %c3 = arith.constant 3 : index
    %c0_59 = arith.constant 0 : index
    %c0_60 = arith.constant 0 : index
    %110 = vector.load %arg16[%c0_58, %c3, %c0_59, %c0_60] : memref<1x4x8x8xf32, #tpu.memory_space<vmem>>, vector<1x1x8x8xf32>
    %111 = vector.shape_cast %110 : vector<1x1x8x8xf32> to vector<8x8xf32>
    %112 = vector.shape_cast %109 : vector<8x8xf32> to vector<1x1x8x8xf32>
    tpu.vector_store %arg16[%c0_58, %c3, %c0_59, %c0_60], %112 {strides = array<i32>} : memref<1x4x8x8xf32, #tpu.memory_space<vmem>>, vector<1x1x8x8xf32>,
    %cst_61 = arith.constant dense<0.000000e+00> : vector<8x8xf32>
    %113 = tpu.matmul %109, %97, %cst_61 {dimension_numbers = #tpu.dot_dimension_numbers<[1], [0], [0], [1], [0, 0, 1, 1], [], []>} : vector<8x8xf32>, vector<8x8xf32>, vector<8x8xf32> -> vector<8x8xf32>
    %114 = vector.extract_strided_slice %25 {offsets = [24, 0], sizes = [8, 32], strides = [1, 1]} : vector<32x32xf32> to vector<8x32xf32>
    %cst_62 = arith.constant dense<0.000000e+00> : vector<8x32xf32>
    %115 = tpu.matmul %113, %114, %cst_62 {dimension_numbers = #tpu.dot_dimension_numbers<[1], [0], [0], [1], [0, 0, 1, 1], [], []>} : vector<8x8xf32>, vector<8x32xf32>, vector<8x32xf32> -> vector<8x32xf32>
    %116 = arith.addf %94, %115 : vector<8x32xf32>
    %c0_63 = arith.constant 0 : index
    %c0_64 = arith.constant 0 : index
    %c0_65 = arith.constant 0 : index
    %117 = vector.load %arg1[%c0_63, %c0_64, %c0_65] : memref<1x8x32xf32, #tpu.memory_space<vmem>>, vector<1x8x32xf32>
    %118 = vector.shape_cast %117 : vector<1x8x32xf32> to vector<8x32xf32>
    %119 = arith.addf %116, %118 : vector<8x32xf32>
    %cst_66 = arith.constant dense<0.000000e+00> : vector<8xf32>
    %120 = vector.multi_reduction <add>, %119, %cst_66 [1] : vector<8x32xf32> to vector<8xf32>
    %121 = vector.shape_cast %120 : vector<8xf32> to vector<8x1xf32>
    %cst_67 = arith.constant 3.200000e+01 : f32
    %122 = vector.broadcast %cst_67 : f32 to vector<8x1xf32>
    %123 = arith.divf %121, %122 : vector<8x1xf32>
    %124 = vector.broadcast %123 : vector<8x1xf32> to vector<8x32xf32>
    %125 = arith.subf %119, %124 : vector<8x32xf32>
    %126 = arith.mulf %125, %125 : vector<8x32xf32>
    %cst_68 = arith.constant dense<0.000000e+00> : vector<8xf32>
    %127 = vector.multi_reduction <add>, %126, %cst_68 [1] : vector<8x32xf32> to vector<8xf32>
    %128 = vector.shape_cast %127 : vector<8xf32> to vector<8x1xf32>
    %cst_69 = arith.constant 3.200000e+01 : f32
    %129 = vector.broadcast %cst_69 : f32 to vector<8x1xf32>
    %130 = arith.divf %128, %129 : vector<8x1xf32>
    %131 = vector.broadcast %123 : vector<8x1xf32> to vector<8x32xf32>
    %132 = arith.subf %119, %131 : vector<8x32xf32>
    %cst_70 = arith.constant 9.99999974E-6 : f32
    %133 = vector.broadcast %cst_70 : f32 to vector<8x1xf32>
    %134 = arith.addf %130, %133 : vector<8x1xf32>
    %135 = math.rsqrt %134 : vector<8x1xf32>
    %136 = vector.broadcast %135 : vector<8x1xf32> to vector<8x32xf32>
    %137 = arith.mulf %132, %136 : vector<8x32xf32>
    %c0_71 = arith.constant 0 : index
    %c0_72 = arith.constant 0 : index
    %138 = vector.load %arg13[%c0_71, %c0_72] : memref<1x32xf32, #tpu.memory_space<vmem>>, vector<1x32xf32>
    %139 = vector.broadcast %138 : vector<1x32xf32> to vector<8x32xf32>
    %140 = arith.mulf %137, %139 : vector<8x32xf32>
    %c0_73 = arith.constant 0 : index
    %c0_74 = arith.constant 0 : index
    %141 = vector.load %arg14[%c0_73, %c0_74] : memref<1x32xf32, #tpu.memory_space<vmem>>, vector<1x32xf32>
    %142 = vector.broadcast %141 : vector<1x32xf32> to vector<8x32xf32>
    %143 = arith.addf %140, %142 : vector<8x32xf32>
    %c0_75 = arith.constant 0 : index
    %c0_76 = arith.constant 0 : index
    %c0_77 = arith.constant 0 : index
    %144 = vector.load %arg15[%c0_75, %c0_76, %c0_77] : memref<1x8x32xf32, #tpu.memory_space<vmem>>, vector<1x8x32xf32>
    %145 = vector.shape_cast %144 : vector<1x8x32xf32> to vector<8x32xf32>
    %146 = vector.shape_cast %143 : vector<8x32xf32> to vector<1x8x32xf32>
    tpu.vector_store %arg15[%c0_75, %c0_76, %c0_77], %146 {strides = array<i32>} : memref<1x8x32xf32, #tpu.memory_space<vmem>>, vector<1x8x32xf32>,
    return
  }
  func.func @transform_0(%arg0: i32) -> (i32, i32, i32) {
    %c0_i32 = arith.constant 0 : i32
    %c0_i32_0 = arith.constant 0 : i32
    %c0_i32_1 = arith.constant 0 : i32
    return %arg0, %c0_i32, %c0_i32_0 : i32, i32, i32
  }
  func.func @transform_1(%arg0: i32) -> (i32, i32, i32) {
    %c0_i32 = arith.constant 0 : i32
    %c0_i32_0 = arith.constant 0 : i32
    %c0_i32_1 = arith.constant 0 : i32
    return %arg0, %c0_i32, %c0_i32_0 : i32, i32, i32
  }
  func.func @transform_2(%arg0: i32) -> (i32, i32, i32) {
    %c0_i32 = arith.constant 0 : i32
    %c0_i32_0 = arith.constant 0 : i32
    %c0_i32_1 = arith.constant 0 : i32
    return %arg0, %c0_i32, %c0_i32_0 : i32, i32, i32
  }
  func.func @transform_3(%arg0: i32) -> (i32, i32, i32) {
    %c0_i32 = arith.constant 0 : i32
    %c0_i32_0 = arith.constant 0 : i32
    %c0_i32_1 = arith.constant 0 : i32
    return %arg0, %c0_i32, %c0_i32_0 : i32, i32, i32
  }
  func.func @transform_4(%arg0: i32) -> (i32, i32) {
    %c0_i32 = arith.constant 0 : i32
    %c0_i32_0 = arith.constant 0 : i32
    %c0_i32_1 = arith.constant 0 : i32
    return %c0_i32, %c0_i32_0 : i32, i32
  }
  func.func @transform_5(%arg0: i32) -> (i32, i32) {
    %c0_i32 = arith.constant 0 : i32
    %c0_i32_0 = arith.constant 0 : i32
    %c0_i32_1 = arith.constant 0 : i32
    return %c0_i32, %c0_i32_0 : i32, i32
  }
  func.func @transform_6(%arg0: i32) -> (i32, i32) {
    %c0_i32 = arith.constant 0 : i32
    %c0_i32_0 = arith.constant 0 : i32
    %c0_i32_1 = arith.constant 0 : i32
    return %c0_i32, %c0_i32_0 : i32, i32
  }
  func.func @transform_7(%arg0: i32) -> (i32, i32) {
    %c0_i32 = arith.constant 0 : i32
    %c0_i32_0 = arith.constant 0 : i32
    %c0_i32_1 = arith.constant 0 : i32
    return %c0_i32, %c0_i32_0 : i32, i32
  }
  func.func @transform_8(%arg0: i32) -> (i32, i32) {
    %c0_i32 = arith.constant 0 : i32
    %c0_i32_0 = arith.constant 0 : i32
    %c0_i32_1 = arith.constant 0 : i32
    return %c0_i32, %c0_i32_0 : i32, i32
  }
  func.func @transform_9(%arg0: i32) -> (i32, i32) {
    %c0_i32 = arith.constant 0 : i32
    %c0_i32_0 = arith.constant 0 : i32
    %c0_i32_1 = arith.constant 0 : i32
    return %c0_i32, %c0_i32_0 : i32, i32
  }
  func.func @transform_10(%arg0: i32) -> (i32, i32) {
    %c0_i32 = arith.constant 0 : i32
    %c0_i32_0 = arith.constant 0 : i32
    %c0_i32_1 = arith.constant 0 : i32
    return %c0_i32, %c0_i32_0 : i32, i32
  }
  func.func @transform_11(%arg0: i32) -> (i32, i32) {
    %c0_i32 = arith.constant 0 : i32
    %c0_i32_0 = arith.constant 0 : i32
    %c0_i32_1 = arith.constant 0 : i32
    return %c0_i32, %c0_i32_0 : i32, i32
  }
  func.func @transform_12(%arg0: i32) -> (i32, i32) {
    %c0_i32 = arith.constant 0 : i32
    %c0_i32_0 = arith.constant 0 : i32
    %c0_i32_1 = arith.constant 0 : i32
    return %c0_i32, %c0_i32_0 : i32, i32
  }
  func.func @transform_13(%arg0: i32) -> (i32, i32) {
    %c0_i32 = arith.constant 0 : i32
    %c0_i32_0 = arith.constant 0 : i32
    %c0_i32_1 = arith.constant 0 : i32
    return %c0_i32, %c0_i32_0 : i32, i32
  }
  func.func @transform_14(%arg0: i32) -> (i32, i32, i32) {
    %c0_i32 = arith.constant 0 : i32
    %c0_i32_0 = arith.constant 0 : i32
    %c0_i32_1 = arith.constant 0 : i32
    return %arg0, %c0_i32, %c0_i32_0 : i32, i32, i32
  }
  func.func @transform_15(%arg0: i32) -> (i32, i32, i32, i32) {
    %c0_i32 = arith.constant 0 : i32
    %c0_i32_0 = arith.constant 0 : i32
    %c0_i32_1 = arith.constant 0 : i32
    %c0_i32_2 = arith.constant 0 : i32
    return %arg0, %c0_i32, %c0_i32_0, %c0_i32_1 : i32, i32, i32, i32
  }
}

</mosaic_0001>

<llo_original>
// kernel: tpu_custom_call.1
$region0: #{tpu_custom_call.1}
  #allocation0 [shape = 'u32[]', space=smem, size = 0x4, offset = 0x4, fixed_abs, tag = 'smem constant byte address 0x4 - core index']
  #allocation1 [shape = 'u32[144,128]{1,0:T(1,128)}', space=vmem, size = 0x12000, scoped, tag = 'internal scratch']
  %s0 = inlined_call_operand.hbm [shape: f32[2,8,32], index: 0, kind: input, shape index: {}]
  %s1 = inlined_call_operand.hbm [shape: f32[2,8,32], index: 1, kind: input, shape index: {}]
  %s2 = inlined_call_operand.hbm [shape: f32[2,8,32], index: 2, kind: input, shape index: {}]
  %s3 = inlined_call_operand.hbm [shape: f32[2,8,8], index: 3, kind: input, shape index: {}]
  %s4 = inlined_call_operand.hbm [shape: f32[32,32], index: 4, kind: input, shape index: {}]
  %s5 = inlined_call_operand.vmem [shape: f32[1,32], index: 5, kind: input, shape index: {}]
  %s6 = inlined_call_operand.hbm [shape: f32[32,32], index: 6, kind: input, shape index: {}]
  %s7 = inlined_call_operand.vmem [shape: f32[1,32], index: 7, kind: input, shape index: {}]
  %s8 = inlined_call_operand.hbm [shape: f32[32,32], index: 8, kind: input, shape index: {}]
  %s9 = inlined_call_operand.vmem [shape: f32[1,32], index: 9, kind: input, shape index: {}]
  %s10 = inlined_call_operand.hbm [shape: f32[32,32], index: 10, kind: input, shape index: {}]
  %s11 = inlined_call_operand.vmem [shape: f32[1,32], index: 11, kind: input, shape index: {}]
  %s12 = inlined_call_operand.vmem [shape: f32[1,32], index: 12, kind: input, shape index: {}]
  %s13 = inlined_call_operand.vmem [shape: f32[1,32], index: 13, kind: input, shape index: {}]
  %s14 = inlined_call_operand.hbm [shape: f32[2,8,32], index: 14, kind: output, shape index: {0}]
  %s15 = inlined_call_operand.hbm [shape: f32[2,4,8,8], index: 15, kind: output, shape index: {1}]
  %16 = xla_tuple %s14, %s15
  %s17 = sld [smem:[#allocation0]]
  $region129: #{tpu_custom_call.1} parent=0
    _
  %s19 = ssub.s32 1, %s17
  %s20 = scalar_select 0, %s19, %s17
  $region1: #{tpu_custom_call.1} parent=0
    #allocation2 [shape = 'u8[8192]{0}', space=vmem, size = 0x2000, scoped, tag = 'input window, operand 0']
    #allocation3 [shape = 's32[2]{0}', space=sflag, size = 0x8, scoped, tag = 'scoped memory for tpu_custom_call.1']
    #allocation4 [shape = 's32[2]{0}', space=sflag, size = 0x8, scoped, tag = 'scoped memory for tpu_custom_call.1']
    #allocation5 [shape = 'u8[8192]{0}', space=vmem, size = 0x2000, scoped, tag = 'input window, operand 1']
    #allocation6 [shape = 's32[2]{0}', space=sflag, size = 0x8, scoped, tag = 'scoped memory for tpu_custom_call.1']
    #allocation7 [shape = 'u8[8192]{0}', space=vmem, size = 0x2000, scoped, tag = 'input window, operand 2']
    #allocation8 [shape = 'u8[8192]{0}', space=vmem, size = 0x2000, scoped, tag = 'input window, operand 3']
    #allocation9 [shape = 's32[2]{0}', space=sflag, size = 0x8, scoped, tag = 'scoped memory for tpu_custom_call.1']
    #allocation10 [shape = 'u8[16384]{0}', space=vmem, size = 0x4000, scoped, tag = 'input window, operand 4, single buffered']
    #allocation11 [shape = 'u8[16384]{0}', space=vmem, size = 0x4000, scoped, tag = 'input window, operand 6, single buffered']
    #allocation12 [shape = 's32[1]{0}', space=sflag, size = 0x4, scoped, tag = 'scoped memory for tpu_custom_call.1']
    #allocation13 [shape = 'u8[16384]{0}', space=vmem, size = 0x4000, scoped, tag = 'input window, operand 8, single buffered']
    #allocation14 [shape = 'u8[16384]{0}', space=vmem, size = 0x4000, scoped, tag = 'input window, operand 10, single buffered']
    #allocation15 [shape = 's32[1]{0}', space=sflag, size = 0x4, scoped, tag = 'scoped memory for tpu_custom_call.1']
    #allocation16 [shape = 'u8[8192]{0}', space=vmem, size = 0x2000, scoped, tag = 'output window, operand 0']
    #allocation17 [shape = 'u8[32768]{0}', space=vmem, size = 0x8000, scoped, tag = 'output window, operand 1']
    #allocation18 [shape = 's32[2]{0}', space=sflag, size = 0x8, scoped, tag = 'scoped memory for tpu_custom_call.1']
    %21 = vsyncpa [#allocation3], 0
    %s22 = scalar_lea.sflag [#allocation3], 1
    %23 = vsyncpa %s22, 0
    %24 = vsyncpa [#allocation6], 0
    %s25 = scalar_lea.sflag [#allocation6], 1
    %26 = vsyncpa %s25, 0
    %27 = vsyncpa [#allocation9], 0
    %s28 = scalar_lea.sflag [#allocation9], 1
    %29 = vsyncpa %s28, 0
    %30 = vsyncpa [#allocation12], 0
    %31 = vsyncpa [#allocation15], 0
    %32 = vsyncpa [#allocation4], 0
    %s33 = scalar_lea.sflag [#allocation4], 1
    %34 = vsyncpa %s33, 0
    %35 = vsyncpa [#allocation18], 0
    %s36 = scalar_lea.sflag [#allocation18], 1
    %37 = vsyncpa %s36, 0
    loop: start=0, step=1, limit=4
    $region2: #{tpu_custom_call.1} parent=1 // loop_pre_header
      _
    $region3: #{tpu_custom_call.1} parent=1 // loop_header
      %s39 = sphi 0, %s43
      %p40 = scmp.ge.s32.totalorder %s39, 4
      %s49 = sphi 0, %s51
      %s52 = sphi 0, %s49
      %s53 = sphi 0, %s52
      %s69 = sphi 0, %s53
      %s75 = sphi 0, %s77
      %s78 = sphi 0, %s75
      %s79 = sphi 0, %s78
      %s95 = sphi 0, %s79
      %s101 = sphi 0, %s103
      %s104 = sphi 0, %s101
      %s105 = sphi 0, %s104
      %s121 = sphi 0, %s105
      %s127 = sphi 0, %s129
      %s130 = sphi 0, %s127
      %s131 = sphi 0, %s130
      %s147 = sphi 0, %s131
      %s151 = sphi 0, %s151
      %s153 = sphi 0, %s151
      %s154 = sphi 0, %s153
      %s168 = sphi 0, %s154
      %s172 = sphi 0, %s172
      %s174 = sphi 0, %s172
      %s175 = sphi 0, %s174
      %s189 = sphi 0, %s175
      %s193 = sphi 0, %s193
      %s195 = sphi 0, %s193
      %s196 = sphi 0, %s195
      %s210 = sphi 0, %s196
      %s214 = sphi 0, %s214
      %s216 = sphi 0, %s214
      %s217 = sphi 0, %s216
      %s231 = sphi 0, %s217
      %s235 = sphi 0, %s235
      %s237 = sphi 0, %s235
      %s238 = sphi 0, %s237
      %s252 = sphi 0, %s238
      %s256 = sphi 0, %s256
      %s258 = sphi 0, %s256
      %s259 = sphi 0, %s258
      %s273 = sphi 0, %s259
      %s277 = sphi 0, %s277
      %s279 = sphi 0, %s277
      %s280 = sphi 0, %s279
      %s294 = sphi 0, %s280
      %s298 = sphi 0, %s298
      %s300 = sphi 0, %s298
      %s301 = sphi 0, %s300
      %s315 = sphi 0, %s301
      %s319 = sphi 0, %s319
      %s321 = sphi 0, %s319
      %s322 = sphi 0, %s321
      %s336 = sphi 0, %s322
      %s340 = sphi 0, %s340
      %s342 = sphi 0, %s340
      %s343 = sphi 0, %s342
      %s357 = sphi 0, %s343
      %s363 = sphi 0, %s365
      %s366 = sphi 0, %s363
      %s367 = sphi 0, %s366
      %s383 = sphi 0, %s367
      %s389 = sphi 0, %s391
      %s392 = sphi 0, %s389
      %s393 = sphi 0, %s392
      %s409 = sphi 0, %s393
    $region4: #{tpu_custom_call.1} parent=1 // loop_header_branch
      %42 = sbr.rel (%p40) target = $region8
    $region5: #{tpu_custom_call.1} parent=1 // loop_body
      %s44 = ssub.s32 %s39, 1
      %s45 = ssub.s32 %s39, 2
      %s46 = sadd.s32 %s39, 1
      %s47 = ssub.s32 %s39, %s46
      %p48 = scmp.eq.s32.totalorder %s47, 0
      %s50 = sadd.s32 %s49, 1
      %s51 = scalar_select %p48, %s49, %s50
      %p54 = pneg %p48
      %p55 = scmp.eq.s32.totalorder %s39, 1
      %p56 = por %p54, %p55
      %p57 = scmp.ne.s32.totalorder %s49, %s52
      %p58 = scmp.eq.s32.totalorder %s39, 0
      %p59 = por %p57, %p58
      %p60 = scmp.ne.s32.totalorder %s49, %s52
      %p61 = scmp.eq.s32.totalorder %s44, 1
      %p62 = por %p60, %p61
      %p63 = scmp.ne.s32.totalorder %s52, %s53
      %p64 = scmp.eq.s32.totalorder %s44, 0
      %p65 = por %p63, %p64
      %p66 = scmp.ne.s32.totalorder %s52, %s53
      %p67 = scmp.eq.s32.totalorder %s45, 1
      %p68 = por %p66, %p67
      %p70 = scmp.ne.s32.totalorder %s53, %s69
      %p71 = scmp.eq.s32.totalorder %s45, 0
      %p72 = por %p70, %p71
      %s73 = ssub.s32 %s39, %s46
      %p74 = scmp.eq.s32.totalorder %s73, 0
      %s76 = sadd.s32 %s75, 1
      %s77 = scalar_select %p74, %s75, %s76
      %p80 = pneg %p74
      %p81 = scmp.eq.s32.totalorder %s39, 1
      %p82 = por %p80, %p81
      %p83 = scmp.ne.s32.totalorder %s75, %s78
      %p84 = scmp.eq.s32.totalorder %s39, 0
      %p85 = por %p83, %p84
      %p86 = scmp.ne.s32.totalorder %s75, %s78
      %p87 = scmp.eq.s32.totalorder %s44, 1
      %p88 = por %p86, %p87
      %p89 = scmp.ne.s32.totalorder %s78, %s79
      %p90 = scmp.eq.s32.totalorder %s44, 0
      %p91 = por %p89, %p90
      %p92 = scmp.ne.s32.totalorder %s78, %s79
      %p93 = scmp.eq.s32.totalorder %s45, 1
      %p94 = por %p92, %p93
      %p96 = scmp.ne.s32.totalorder %s79, %s95
      %p97 = scmp.eq.s32.totalorder %s45, 0
      %p98 = por %p96, %p97
      %s99 = ssub.s32 %s39, %s46
      %p100 = scmp.eq.s32.totalorder %s99, 0
      %s102 = sadd.s32 %s101, 1
      %s103 = scalar_select %p100, %s101, %s102
      %p106 = pneg %p100
      %p107 = scmp.eq.s32.totalorder %s39, 1
      %p108 = por %p106, %p107
      %p109 = scmp.ne.s32.totalorder %s101, %s104
      %p110 = scmp.eq.s32.totalorder %s39, 0
      %p111 = por %p109, %p110
      %p112 = scmp.ne.s32.totalorder %s101, %s104
      %p113 = scmp.eq.s32.totalorder %s44, 1
      %p114 = por %p112, %p113
      %p115 = scmp.ne.s32.totalorder %s104, %s105
      %p116 = scmp.eq.s32.totalorder %s44, 0
      %p117 = por %p115, %p116
      %p118 = scmp.ne.s32.totalorder %s104, %s105
      %p119 = scmp.eq.s32.totalorder %s45, 1
      %p120 = por %p118, %p119
      %p122 = scmp.ne.s32.totalorder %s105, %s121
      %p123 = scmp.eq.s32.totalorder %s45, 0
      %p124 = por %p122, %p123
      %s125 = ssub.s32 %s39, %s46
      %p126 = scmp.eq.s32.totalorder %s125, 0
      %s128 = sadd.s32 %s127, 1
      %s129 = scalar_select %p126, %s127, %s128
      %p132 = pneg %p126
      %p133 = scmp.eq.s32.totalorder %s39, 1
      %p134 = por %p132, %p133
      %p135 = scmp.ne.s32.totalorder %s127, %s130
      %p136 = scmp.eq.s32.totalorder %s39, 0
      %p137 = por %p135, %p136
      %p138 = scmp.ne.s32.totalorder %s127, %s130
      %p139 = scmp.eq.s32.totalorder %s44, 1
      %p140 = por %p138, %p139
      %p141 = scmp.ne.s32.totalorder %s130, %s131
      %p142 = scmp.eq.s32.totalorder %s44, 0
      %p143 = por %p141, %p142
      %p144 = scmp.ne.s32.totalorder %s130, %s131
      %p145 = scmp.eq.s32.totalorder %s45, 1
      %p146 = por %p144, %p145
      %p148 = scmp.ne.s32.totalorder %s131, %s147
      %p149 = scmp.eq.s32.totalorder %s45, 0
      %p150 = por %p148, %p149
      %s152 = sadd.s32 %s151, 1
      %p155 = scmp.eq.s32.totalorder %s39, 1
      %p156 = scmp.ne.s32.totalorder %s151, %s153
      %p157 = scmp.eq.s32.totalorder %s39, 0
      %p158 = por %p156, %p157
      %p159 = scmp.ne.s32.totalorder %s151, %s153
      %p160 = scmp.eq.s32.totalorder %s44, 1
      %p161 = por %p159, %p160
      %p162 = scmp.ne.s32.totalorder %s153, %s154
      %p163 = scmp.eq.s32.totalorder %s44, 0
      %p164 = por %p162, %p163
      %p165 = scmp.ne.s32.totalorder %s153, %s154
      %p166 = scmp.eq.s32.totalorder %s45, 1
      %p167 = por %p165, %p166
      %p169 = scmp.ne.s32.totalorder %s154, %s168
      %p170 = scmp.eq.s32.totalorder %s45, 0
      %p171 = por %p169, %p170
      %s173 = sadd.s32 %s172, 1
      %p176 = scmp.eq.s32.totalorder %s39, 1
      %p177 = scmp.ne.s32.totalorder %s172, %s174
      %p178 = scmp.eq.s32.totalorder %s39, 0
      %p179 = por %p177, %p178
      %p180 = scmp.ne.s32.totalorder %s172, %s174
      %p181 = scmp.eq.s32.totalorder %s44, 1
      %p182 = por %p180, %p181
      %p183 = scmp.ne.s32.totalorder %s174, %s175
      %p184 = scmp.eq.s32.totalorder %s44, 0
      %p185 = por %p183, %p184
      %p186 = scmp.ne.s32.totalorder %s174, %s175
      %p187 = scmp.eq.s32.totalorder %s45, 1
      %p188 = por %p186, %p187
      %p190 = scmp.ne.s32.totalorder %s175, %s189
      %p191 = scmp.eq.s32.totalorder %s45, 0
      %p192 = por %p190, %p191
      %s194 = sadd.s32 %s193, 1
      %p197 = scmp.eq.s32.totalorder %s39, 1
      %p198 = scmp.ne.s32.totalorder %s193, %s195
      %p199 = scmp.eq.s32.totalorder %s39, 0
      %p200 = por %p198, %p199
      %p201 = scmp.ne.s32.totalorder %s193, %s195
      %p202 = scmp.eq.s32.totalorder %s44, 1
      %p203 = por %p201, %p202
      %p204 = scmp.ne.s32.totalorder %s195, %s196
      %p205 = scmp.eq.s32.totalorder %s44, 0
      %p206 = por %p204, %p205
      %p207 = scmp.ne.s32.totalorder %s195, %s196
      %p208 = scmp.eq.s32.totalorder %s45, 1
      %p209 = por %p207, %p208
      %p211 = scmp.ne.s32.totalorder %s196, %s210
      %p212 = scmp.eq.s32.totalorder %s45, 0
      %p213 = por %p211, %p212
      %s215 = sadd.s32 %s214, 1
      %p218 = scmp.eq.s32.totalorder %s39, 1
      %p219 = scmp.ne.s32.totalorder %s214, %s216
      %p220 = scmp.eq.s32.totalorder %s39, 0
      %p221 = por %p219, %p220
      %p222 = scmp.ne.s32.totalorder %s214, %s216
      %p223 = scmp.eq.s32.totalorder %s44, 1
      %p224 = por %p222, %p223
      %p225 = scmp.ne.s32.totalorder %s216, %s217
      %p226 = scmp.eq.s32.totalorder %s44, 0
      %p227 = por %p225, %p226
      %p228 = scmp.ne.s32.totalorder %s216, %s217
      %p229 = scmp.eq.s32.totalorder %s45, 1
      %p230 = por %p228, %p229
      %p232 = scmp.ne.s32.totalorder %s217, %s231
      %p233 = scmp.eq.s32.totalorder %s45, 0
      %p234 = por %p232, %p233
      %s236 = sadd.s32 %s235, 1
      %p239 = scmp.eq.s32.totalorder %s39, 1
      %p240 = scmp.ne.s32.totalorder %s235, %s237
      %p241 = scmp.eq.s32.totalorder %s39, 0
      %p242 = por %p240, %p241
      %p243 = scmp.ne.s32.totalorder %s235, %s237
      %p244 = scmp.eq.s32.totalorder %s44, 1
      %p245 = por %p243, %p244
      %p246 = scmp.ne.s32.totalorder %s237, %s238
      %p247 = scmp.eq.s32.totalorder %s44, 0
      %p248 = por %p246, %p247
      %p249 = scmp.ne.s32.totalorder %s237, %s238
      %p250 = scmp.eq.s32.totalorder %s45, 1
      %p251 = por %p249, %p250
      %p253 = scmp.ne.s32.totalorder %s238, %s252
      %p254 = scmp.eq.s32.totalorder %s45, 0
      %p255 = por %p253, %p254
      %s257 = sadd.s32 %s256, 1
      %p260 = scmp.eq.s32.totalorder %s39, 1
      %p261 = scmp.ne.s32.totalorder %s256, %s258
      %p262 = scmp.eq.s32.totalorder %s39, 0
      %p263 = por %p261, %p262
      %p264 = scmp.ne.s32.totalorder %s256, %s258
      %p265 = scmp.eq.s32.totalorder %s44, 1
      %p266 = por %p264, %p265
      %p267 = scmp.ne.s32.totalorder %s258, %s259
      %p268 = scmp.eq.s32.totalorder %s44, 0
      %p269 = por %p267, %p268
      %p270 = scmp.ne.s32.totalorder %s258, %s259
      %p271 = scmp.eq.s32.totalorder %s45, 1
      %p272 = por %p270, %p271
      %p274 = scmp.ne.s32.totalorder %s259, %s273
      %p275 = scmp.eq.s32.totalorder %s45, 0
      %p276 = por %p274, %p275
      %s278 = sadd.s32 %s277, 1
      %p281 = scmp.eq.s32.totalorder %s39, 1
      %p282 = scmp.ne.s32.totalorder %s277, %s279
      %p283 = scmp.eq.s32.totalorder %s39, 0
      %p284 = por %p282, %p283
      %p285 = scmp.ne.s32.totalorder %s277, %s279
      %p286 = scmp.eq.s32.totalorder %s44, 1
      %p287 = por %p285, %p286
      %p288 = scmp.ne.s32.totalorder %s279, %s280
      %p289 = scmp.eq.s32.totalorder %s44, 0
      %p290 = por %p288, %p289
      %p291 = scmp.ne.s32.totalorder %s279, %s280
      %p292 = scmp.eq.s32.totalorder %s45, 1
      %p293 = por %p291, %p292
      %p295 = scmp.ne.s32.totalorder %s280, %s294
      %p296 = scmp.eq.s32.totalorder %s45, 0
      %p297 = por %p295, %p296
      %s299 = sadd.s32 %s298, 1
      %p302 = scmp.eq.s32.totalorder %s39, 1
      %p303 = scmp.ne.s32.totalorder %s298, %s300
      %p304 = scmp.eq.s32.totalorder %s39, 0
      %p305 = por %p303, %p304
      %p306 = scmp.ne.s32.totalorder %s298, %s300
      %p307 = scmp.eq.s32.totalorder %s44, 1
      %p308 = por %p306, %p307
      %p309 = scmp.ne.s32.totalorder %s300, %s301
      %p310 = scmp.eq.s32.totalorder %s44, 0
      %p311 = por %p309, %p310
      %p312 = scmp.ne.s32.totalorder %s300, %s301
      %p313 = scmp.eq.s32.totalorder %s45, 1
      %p314 = por %p312, %p313
      %p316 = scmp.ne.s32.totalorder %s301, %s315
      %p317 = scmp.eq.s32.totalorder %s45, 0
      %p318 = por %p316, %p317
      %s320 = sadd.s32 %s319, 1
      %p323 = scmp.eq.s32.totalorder %s39, 1
      %p324 = scmp.ne.s32.totalorder %s319, %s321
      %p325 = scmp.eq.s32.totalorder %s39, 0
      %p326 = por %p324, %p325
      %p327 = scmp.ne.s32.totalorder %s319, %s321
      %p328 = scmp.eq.s32.totalorder %s44, 1
      %p329 = por %p327, %p328
      %p330 = scmp.ne.s32.totalorder %s321, %s322
      %p331 = scmp.eq.s32.totalorder %s44, 0
      %p332 = por %p330, %p331
      %p333 = scmp.ne.s32.totalorder %s321, %s322
      %p334 = scmp.eq.s32.totalorder %s45, 1
      %p335 = por %p333, %p334
      %p337 = scmp.ne.s32.totalorder %s322, %s336
      %p338 = scmp.eq.s32.totalorder %s45, 0
      %p339 = por %p337, %p338
      %s341 = sadd.s32 %s340, 1
      %p344 = scmp.eq.s32.totalorder %s39, 1
      %p345 = scmp.ne.s32.totalorder %s340, %s342
      %p346 = scmp.eq.s32.totalorder %s39, 0
      %p347 = por %p345, %p346
      %p348 = scmp.ne.s32.totalorder %s340, %s342
      %p349 = scmp.eq.s32.totalorder %s44, 1
      %p350 = por %p348, %p349
      %p351 = scmp.ne.s32.totalorder %s342, %s343
      %p352 = scmp.eq.s32.totalorder %s44, 0
      %p353 = por %p351, %p352
      %p354 = scmp.ne.s32.totalorder %s342, %s343
      %p355 = scmp.eq.s32.totalorder %s45, 1
      %p356 = por %p354, %p355
      %p358 = scmp.ne.s32.totalorder %s343, %s357
      %p359 = scmp.eq.s32.totalorder %s45, 0
      %p360 = por %p358, %p359
      %s361 = ssub.s32 %s39, %s46
      %p362 = scmp.eq.s32.totalorder %s361, 0
      %s364 = sadd.s32 %s363, 1
      %s365 = scalar_select %p362, %s363, %s364
      %p368 = pneg %p362
      %p369 = scmp.eq.s32.totalorder %s39, 1
      %p370 = por %p368, %p369
      %p371 = scmp.ne.s32.totalorder %s363, %s366
      %p372 = scmp.eq.s32.totalorder %s39, 0
      %p373 = por %p371, %p372
      %p374 = scmp.ne.s32.totalorder %s363, %s366
      %p375 = scmp.eq.s32.totalorder %s44, 1
      %p376 = por %p374, %p375
      %p377 = scmp.ne.s32.totalorder %s366, %s367
      %p378 = scmp.eq.s32.totalorder %s44, 0
      %p379 = por %p377, %p378
      %p380 = scmp.ne.s32.totalorder %s366, %s367
      %p381 = scmp.eq.s32.totalorder %s45, 1
      %p382 = por %p380, %p381
      %p384 = scmp.ne.s32.totalorder %s367, %s383
      %p385 = scmp.eq.s32.totalorder %s45, 0
      %p386 = por %p384, %p385
      %s387 = ssub.s32 %s39, %s46
      %p388 = scmp.eq.s32.totalorder %s387, 0
      %s390 = sadd.s32 %s389, 1
      %s391 = scalar_select %p388, %s389, %s390
      %p394 = pneg %p388
      %p395 = scmp.eq.s32.totalorder %s39, 1
      %p396 = por %p394, %p395
      %p397 = scmp.ne.s32.totalorder %s389, %s392
      %p398 = scmp.eq.s32.totalorder %s39, 0
      %p399 = por %p397, %p398
      %p400 = scmp.ne.s32.totalorder %s389, %s392
      %p401 = scmp.eq.s32.totalorder %s44, 1
      %p402 = por %p400, %p401
      %p403 = scmp.ne.s32.totalorder %s392, %s393
      %p404 = scmp.eq.s32.totalorder %s44, 0
      %p405 = por %p403, %p404
      %p406 = scmp.ne.s32.totalorder %s392, %s393
      %p407 = scmp.eq.s32.totalorder %s45, 1
      %p408 = por %p406, %p407
      %p410 = scmp.ne.s32.totalorder %s393, %s409
      %p411 = scmp.eq.s32.totalorder %s45, 0
      %p412 = por %p410, %p411
      %p413 = scmp.le.s32.totalorder 1, %s39
      %p414 = scmp.lt.s32.totalorder %s39, 3
      %p415 = pnand %p413, %p414
      %p416 = pneg %p415
      // Predicated region
      $region9: #{tpu_custom_call.1} parent=5 // pred_check
        _
      $region10: #{tpu_custom_call.1} parent=5 // pred_check_branch
        %418 = sbr.rel (%p415) target = $region12
      $region11: #{tpu_custom_call.1} parent=5 // pred_region
        %s419 = ssub.s32 %s39, 1
        // Predicated region
        $region13: #{tpu_custom_call.1} parent=11 // pred_check
          %p420 = pneg %p164
        $region14: #{tpu_custom_call.1} parent=11 // pred_check_branch
          %422 = sbr.rel (%p420) target = $region16
        $region15: #{tpu_custom_call.1} parent=11 // pred_region
          %s424 = ssub.s32 512, 512
          %425 = vsyncadd [#allocation9], %s424
          %s426 = sshll.u32 [#allocation10], 4
          %s427 = int_to_ptr.vmem [resolvable:$true] %s426
          %432 = dma.hbm_to_vmem [thread:$0]  %s4, 512, %s427, [#allocation9], 128, 128, 8
        $region16: #{tpu_custom_call.1} parent=11 // pred_fallthru
          _
        // Predicated region
        $region17: #{tpu_custom_call.1} parent=11 // pred_check
          %p433 = pneg %p185
        $region18: #{tpu_custom_call.1} parent=11 // pred_check_branch
          %435 = sbr.rel (%p433) target = $region20
        $region19: #{tpu_custom_call.1} parent=11 // pred_region
          _
        $region20: #{tpu_custom_call.1} parent=11 // pred_fallthru
          _
        // Predicated region
        $region21: #{tpu_custom_call.1} parent=11 // pred_check
          %p436 = pneg %p206
        $region22: #{tpu_custom_call.1} parent=11 // pred_check_branch
          %438 = sbr.rel (%p436) target = $region24
        $region23: #{tpu_custom_call.1} parent=11 // pred_region
          %s440 = ssub.s32 512, 512
          %441 = vsyncadd [#allocation12], %s440
          %s442 = sshll.u32 [#allocation11], 4
          %s443 = int_to_ptr.vmem [resolvable:$true] %s442
          %448 = dma.hbm_to_vmem [thread:$0]  %s6, 512, %s443, [#allocation12], 128, 128, 8
        $region24: #{tpu_custom_call.1} parent=11 // pred_fallthru
          _
        // Predicated region
        $region25: #{tpu_custom_call.1} parent=11 // pred_check
          %p449 = pneg %p227
        $region26: #{tpu_custom_call.1} parent=11 // pred_check_branch
          %451 = sbr.rel (%p449) target = $region28
        $region27: #{tpu_custom_call.1} parent=11 // pred_region
          _
        $region28: #{tpu_custom_call.1} parent=11 // pred_fallthru
          _
        // Predicated region
        $region29: #{tpu_custom_call.1} parent=11 // pred_check
          %p452 = pneg %p248
        $region30: #{tpu_custom_call.1} parent=11 // pred_check_branch
          %454 = sbr.rel (%p452) target = $region32
        $region31: #{tpu_custom_call.1} parent=11 // pred_region
          %s456 = ssub.s32 512, 512
          %457 = vsyncadd [#allocation12], %s456
          %s458 = sshll.u32 [#allocation13], 4
          %s459 = int_to_ptr.vmem [resolvable:$true] %s458
          %464 = dma.hbm_to_vmem [thread:$0]  %s8, 512, %s459, [#allocation12], 128, 128, 8
        $region32: #{tpu_custom_call.1} parent=11 // pred_fallthru
          _
        // Predicated region
        $region33: #{tpu_custom_call.1} parent=11 // pred_check
          %p465 = pneg %p269
        $region34: #{tpu_custom_call.1} parent=11 // pred_check_branch
          %467 = sbr.rel (%p465) target = $region36
        $region35: #{tpu_custom_call.1} parent=11 // pred_region
          _
        $region36: #{tpu_custom_call.1} parent=11 // pred_fallthru
          _
        // Predicated region
        $region37: #{tpu_custom_call.1} parent=11 // pred_check
          %p468 = pneg %p290
        $region38: #{tpu_custom_call.1} parent=11 // pred_check_branch
          %470 = sbr.rel (%p468) target = $region40
        $region39: #{tpu_custom_call.1} parent=11 // pred_region
          %s472 = ssub.s32 512, 512
          %473 = vsyncadd [#allocation15], %s472
          %s474 = sshll.u32 [#allocation14], 4
          %s475 = int_to_ptr.vmem [resolvable:$true] %s474
          %480 = dma.hbm_to_vmem [thread:$0]  %s10, 512, %s475, [#allocation15], 128, 128, 8
        $region40: #{tpu_custom_call.1} parent=11 // pred_fallthru
          _
        // Predicated region
        $region41: #{tpu_custom_call.1} parent=11 // pred_check
          %p481 = pneg %p311
        $region42: #{tpu_custom_call.1} parent=11 // pred_check_branch
          %483 = sbr.rel (%p481) target = $region44
        $region43: #{tpu_custom_call.1} parent=11 // pred_region
          _
        $region44: #{tpu_custom_call.1} parent=11 // pred_fallthru
          _
        // Predicated region
        $region45: #{tpu_custom_call.1} parent=11 // pred_check
          %p484 = pneg %p332
        $region46: #{tpu_custom_call.1} parent=11 // pred_check_branch
          %486 = sbr.rel (%p484) target = $region48
        $region47: #{tpu_custom_call.1} parent=11 // pred_region
          _
        $region48: #{tpu_custom_call.1} parent=11 // pred_fallthru
          _
        // Predicated region
        $region49: #{tpu_custom_call.1} parent=11 // pred_check
          %p487 = pneg %p353
        $region50: #{tpu_custom_call.1} parent=11 // pred_check_branch
          %489 = sbr.rel (%p487) target = $region52
        $region51: #{tpu_custom_call.1} parent=11 // pred_region
          _
        $region52: #{tpu_custom_call.1} parent=11 // pred_fallthru
          _
      $region12: #{tpu_custom_call.1} parent=5 // pred_fallthru
        _
      %p490 = scmp.lt.s32.totalorder %s39, 2
      // Predicated region
      $region53: #{tpu_custom_call.1} parent=5 // pred_check
        %p491 = pneg %p490
      $region54: #{tpu_custom_call.1} parent=5 // pred_check_branch
        %493 = sbr.rel (%p491) target = $region56
      $region55: #{tpu_custom_call.1} parent=5 // pred_region
        // Predicated region
        $region57: #{tpu_custom_call.1} parent=55 // pred_check
          %p494 = pneg %p59
        $region58: #{tpu_custom_call.1} parent=55 // pred_check_branch
          %496 = sbr.rel (%p494) target = $region60
        $region59: #{tpu_custom_call.1} parent=55 // pred_region
          %s497 = sand.u32 %s49, 1
          %s498 = scalar_lea.sflag [#allocation3], %s497
          %s499 = sand.u32 %s49, 1
          %s500 = smul.addr %s499, 8
          %s501 = scalar_lea.vmem [#allocation2], %s500
          %s503 = ssub.s32 128, 128
          %504 = vsyncadd %s498, %s503
          %s505 = smul.addr %s39, 128
          %s506 = scalar_lea.hbm %s0, %s505
          %s508 = sshll.u32 %s501, 4
          %s509 = int_to_ptr.vmem [resolvable:$true] %s508
          %511 = dma.hbm_to_vmem [thread:$0]  %s506, 128, %s509, %s498
        $region60: #{tpu_custom_call.1} parent=55 // pred_fallthru
          _
        // Predicated region
        $region61: #{tpu_custom_call.1} parent=55 // pred_check
          %p512 = pneg %p85
        $region62: #{tpu_custom_call.1} parent=55 // pred_check_branch
          %514 = sbr.rel (%p512) target = $region64
        $region63: #{tpu_custom_call.1} parent=55 // pred_region
          %s515 = sand.u32 %s39, 1
          %s516 = scalar_lea.sflag [#allocation6], %s515
          %s517 = sand.u32 %s75, 1
          %s518 = smul.addr %s517, 8
          %s519 = scalar_lea.vmem [#allocation5], %s518
          %s521 = ssub.s32 128, 128
          %522 = vsyncadd %s516, %s521
          %s523 = smul.addr %s39, 128
          %s524 = scalar_lea.hbm %s1, %s523
          %s526 = sshll.u32 %s519, 4
          %s527 = int_to_ptr.vmem [resolvable:$true] %s526
          %529 = dma.hbm_to_vmem [thread:$0]  %s524, 128, %s527, %s516
        $region64: #{tpu_custom_call.1} parent=55 // pred_fallthru
          _
        // Predicated region
        $region65: #{tpu_custom_call.1} parent=55 // pred_check
          %p530 = pneg %p111
        $region66: #{tpu_custom_call.1} parent=55 // pred_check_branch
          %532 = sbr.rel (%p530) target = $region68
        $region67: #{tpu_custom_call.1} parent=55 // pred_region
          %s533 = sand.u32 %s39, 1
          %s534 = scalar_lea.sflag [#allocation6], %s533
          %s535 = sand.u32 %s101, 1
          %s536 = smul.addr %s535, 8
          %s537 = scalar_lea.vmem [#allocation7], %s536
          %s539 = ssub.s32 128, 128
          %540 = vsyncadd %s534, %s539
          %s541 = smul.addr %s39, 128
          %s542 = scalar_lea.hbm %s2, %s541
          %s544 = sshll.u32 %s537, 4
          %s545 = int_to_ptr.vmem [resolvable:$true] %s544
          %547 = dma.hbm_to_vmem [thread:$0]  %s542, 128, %s545, %s534
        $region68: #{tpu_custom_call.1} parent=55 // pred_fallthru
          _
        // Predicated region
        $region69: #{tpu_custom_call.1} parent=55 // pred_check
          %p548 = pneg %p137
        $region70: #{tpu_custom_call.1} parent=55 // pred_check_branch
          %550 = sbr.rel (%p548) target = $region72
        $region71: #{tpu_custom_call.1} parent=55 // pred_region
          %s551 = sand.u32 %s39, 1
          %s552 = scalar_lea.sflag [#allocation9], %s551
          %s553 = sand.u32 %s127, 1
          %s554 = smul.addr %s553, 8
          %s555 = scalar_lea.vmem [#allocation8], %s554
          %s557 = ssub.s32 128, 128
          %558 = vsyncadd %s552, %s557
          %s559 = smul.addr %s39, 128
          %s560 = scalar_lea.hbm %s3, %s559
          %s562 = sshll.u32 %s555, 4
          %s563 = int_to_ptr.vmem [resolvable:$true] %s562
          %565 = dma.hbm_to_vmem [thread:$0]  %s560, 128, %s563, %s552
        $region72: #{tpu_custom_call.1} parent=55 // pred_fallthru
          _
      $region56: #{tpu_custom_call.1} parent=5 // pred_fallthru
        _
      %p566 = scmp.le.s32.totalorder 1, %s39
      %p567 = scmp.lt.s32.totalorder %s39, 3
      %p568 = pnand %p566, %p567
      %p569 = pneg %p568
      // Predicated region
      $region73: #{tpu_custom_call.1} parent=5 // pred_check
        _
      $region74: #{tpu_custom_call.1} parent=5 // pred_check_branch
        %571 = sbr.rel (%p568) target = $region76
      $region75: #{tpu_custom_call.1} parent=5 // pred_region
        %s572 = ssub.s32 %s39, 1
        %s573 = sand.u32 %s52, 1
        %s574 = scalar_lea.sflag [#allocation3], %s573
        %s575 = sand.u32 %s52, 1
        %s576 = smul.addr %s575, 8
        %s577 = scalar_lea.vmem [#allocation2], %s576
        // Predicated region
        $region77: #{tpu_custom_call.1} parent=75 // pred_check
          %p578 = pneg %p65
        $region78: #{tpu_custom_call.1} parent=75 // pred_check_branch
          %580 = sbr.rel (%p578) target = $region80
        $region79: #{tpu_custom_call.1} parent=75 // pred_region
          %581 = dma.done %s574, 128
        $region80: #{tpu_custom_call.1} parent=75 // pred_fallthru
          _
        %s582 = sand.u32 %s44, 1
        %s583 = scalar_lea.sflag [#allocation6], %s582
        %s584 = sand.u32 %s78, 1
        %s585 = smul.addr %s584, 8
        %s586 = scalar_lea.vmem [#allocation5], %s585
        // Predicated region
        $region81: #{tpu_custom_call.1} parent=75 // pred_check
          %p587 = pneg %p91
        $region82: #{tpu_custom_call.1} parent=75 // pred_check_branch
          %589 = sbr.rel (%p587) target = $region84
        $region83: #{tpu_custom_call.1} parent=75 // pred_region
          %590 = dma.done %s583, 128
        $region84: #{tpu_custom_call.1} parent=75 // pred_fallthru
          _
        %s591 = sand.u32 %s44, 1
        %s592 = scalar_lea.sflag [#allocation6], %s591
        %s593 = sand.u32 %s104, 1
        %s594 = smul.addr %s593, 8
        %s595 = scalar_lea.vmem [#allocation7], %s594
        // Predicated region
        $region85: #{tpu_custom_call.1} parent=75 // pred_check
          %p596 = pneg %p117
        $region86: #{tpu_custom_call.1} parent=75 // pred_check_branch
          %598 = sbr.rel (%p596) target = $region88
        $region87: #{tpu_custom_call.1} parent=75 // pred_region
          %599 = dma.done %s592, 128
        $region88: #{tpu_custom_call.1} parent=75 // pred_fallthru
          _
        %s600 = sand.u32 %s44, 1
        %s601 = scalar_lea.sflag [#allocation9], %s600
        %s602 = sand.u32 %s130, 1
        %s603 = smul.addr %s602, 8
        %s604 = scalar_lea.vmem [#allocation8], %s603
        // Predicated region
        $region89: #{tpu_custom_call.1} parent=75 // pred_check
          %p605 = pneg %p143
        $region90: #{tpu_custom_call.1} parent=75 // pred_check_branch
          %607 = sbr.rel (%p605) target = $region92
        $region91: #{tpu_custom_call.1} parent=75 // pred_region
          %608 = dma.done %s601, 128
        $region92: #{tpu_custom_call.1} parent=75 // pred_fallthru
          _
        // Predicated region
        $region93: #{tpu_custom_call.1} parent=75 // pred_check
          %p609 = pneg %p164
        $region94: #{tpu_custom_call.1} parent=75 // pred_check_branch
          %611 = sbr.rel (%p609) target = $region96
        $region95: #{tpu_custom_call.1} parent=75 // pred_region
          %612 = dma.done [#allocation9], 512
        $region96: #{tpu_custom_call.1} parent=75 // pred_fallthru
          _
        // Predicated region
        $region97: #{tpu_custom_call.1} parent=75 // pred_check
          %p613 = pneg %p206
        $region98: #{tpu_custom_call.1} parent=75 // pred_check_branch
          %615 = sbr.rel (%p613) target = $region100
        $region99: #{tpu_custom_call.1} parent=75 // pred_region
          %616 = dma.done [#allocation12], 512
        $region100: #{tpu_custom_call.1} parent=75 // pred_fallthru
          _
        // Predicated region
        $region101: #{tpu_custom_call.1} parent=75 // pred_check
          %p617 = pneg %p248
        $region102: #{tpu_custom_call.1} parent=75 // pred_check_branch
          %619 = sbr.rel (%p617) target = $region104
        $region103: #{tpu_custom_call.1} parent=75 // pred_region
          %620 = dma.done [#allocation12], 512
        $region104: #{tpu_custom_call.1} parent=75 // pred_fallthru
          _
        // Predicated region
        $region105: #{tpu_custom_call.1} parent=75 // pred_check
          %p621 = pneg %p290
        $region106: #{tpu_custom_call.1} parent=75 // pred_check_branch
          %623 = sbr.rel (%p621) target = $region108
        $region107: #{tpu_custom_call.1} parent=75 // pred_region
          %624 = dma.done [#allocation15], 512
        $region108: #{tpu_custom_call.1} parent=75 // pred_fallthru
          _
        %s625 = sand.u32 %s52, 1
        %s626 = scalar_lea.sflag [#allocation3], %s625
        %s627 = sand.u32 %s52, 1
        %s628 = smul.addr %s627, 8
        %s629 = scalar_lea.vmem [#allocation2], %s628
        %p630 = pneg %p65
        %p631 = pneg %p62
        %s632 = sand.u32 %s44, 1
        %s633 = scalar_lea.sflag [#allocation6], %s632
        %s634 = sand.u32 %s78, 1
        %s635 = smul.addr %s634, 8
        %s636 = scalar_lea.vmem [#allocation5], %s635
        %p637 = pneg %p91
        %p638 = pneg %p88
        %s639 = sand.u32 %s44, 1
        %s640 = scalar_lea.sflag [#allocation6], %s639
        %s641 = sand.u32 %s104, 1
        %s642 = smul.addr %s641, 8
        %s643 = scalar_lea.vmem [#allocation7], %s642
        %p644 = pneg %p117
        %p645 = pneg %p114
        %s646 = sand.u32 %s44, 1
        %s647 = scalar_lea.sflag [#allocation9], %s646
        %s648 = sand.u32 %s130, 1
        %s649 = smul.addr %s648, 8
        %s650 = scalar_lea.vmem [#allocation8], %s649
        %p651 = pneg %p143
        %p652 = pneg %p140
        %p653 = pneg %p164
        %p654 = pneg %p161
        %p655 = pneg %p185
        %p656 = pneg %p182
        %p657 = pneg %p206
        %p658 = pneg %p203
        %p659 = pneg %p227
        %p660 = pneg %p224
        %p661 = pneg %p248
        %p662 = pneg %p245
        %p663 = pneg %p269
        %p664 = pneg %p266
        %p665 = pneg %p290
        %p666 = pneg %p287
        %p667 = pneg %p311
        %p668 = pneg %p308
        %p669 = pneg %p332
        %p670 = pneg %p329
        %p671 = pneg %p353
        %p672 = pneg %p350
        %p673 = pneg %p379
        %p674 = pneg %p376
        %s675 = sand.u32 %s366, 1
        %s676 = scalar_lea.sflag [#allocation4], %s675
        %s677 = sand.u32 %s366, 1
        %s678 = smul.addr %s677, 8
        %s679 = scalar_lea.vmem [#allocation16], %s678
        %p680 = pneg %p405
        %p681 = pneg %p402
        %s682 = sand.u32 %s392, 1
        %s683 = scalar_lea.sflag [#allocation18], %s682
        %s684 = sand.u32 %s392, 1
        %s685 = smul.addr %s684, 32
        %s686 = scalar_lea.vmem [#allocation17], %s685
        %v687 = vld [vmem:[%s577] sm:$0xff]
        %v688 = vld [vmem:[#allocation10] sm:$0xff]
        %v689 = vld [vmem:[#allocation10 + $0x8] sm:$0xff]
        %v690 = vld [vmem:[#allocation10 + $0x10] sm:$0xff]
        %v691 = vld [vmem:[#allocation10 + $0x18] sm:$0xff]
        %v692 = vld [vmem:[%s5] sm:$0x1]
        %v694 = vlaneseq
        %v695 = vshrl.u32 %v694, 7
        %v696 = vsub.s32 0, %v695
        %v697 = vrot.slane %v692, %v696
        %vm699 = vcmask 261120
        %v701 = vsel %vm699, %v687, 0
        %703 = vmatprep.subr.mxu0 0.0
        %704 = vmatpush1.msra.mxu0 0.0
        %705 = vmatprep.subr.mxu0 0.0
        %706 = vmatpush1.msra.mxu0 0.0
        %707 = vmatprep.subr.mxu0 0.0
        %708 = vmatpush1.msra.mxu0 0.0
        %709 = vmatprep.subr.mxu0 0.0
        %710 = vmatpush1.msra.mxu0 0.0
        %711 = vmatprep.subr.mxu0 0.0
        %712 = vmatpush1.msra.mxu0 0.0
        %713 = vmatprep.subr.mxu0 0.0
        %714 = vmatpush1.msra.mxu0 0.0
        %715 = vmatprep.subr.mxu0 0.0
        %716 = vmatpush1.msra.mxu0 0.0
        %717 = vmatprep.subr.mxu0 0.0
        %718 = vmatpush1.msra.mxu0 0.0
        %719 = vmatprep.subr.mxu0 0.0
        %720 = vmatpush1.msra.mxu0 0.0
        %721 = vmatprep.subr.mxu0 0.0
        %722 = vmatpush1.msra.mxu0 0.0
        %723 = vmatprep.subr.mxu0 0.0
        %724 = vmatpush1.msra.mxu0 0.0
        %725 = vmatprep.subr.mxu0 0.0
        %726 = vmatpush1.msra.mxu0 0.0
        %727 = vmatprep.subr.mxu0 0.0
        %728 = vmatpush1.msra.mxu0 %v691
        %729 = vmatprep.subr.mxu0 0.0
        %730 = vmatpush1.msra.mxu0 %v690
        %731 = vmatprep.subr.mxu0 0.0
        %732 = vmatpush1.msra.mxu0 %v689
        %733 = vmatprep.subr.mxu0 0.0
        %734 = vmatpush1.msra.mxu0 %v688
        %735 = vmatprep.subr.mxu0 0.0
        %736 = vmatpush2.msra.mxu0 0.0
        %737 = vmatprep.subr.mxu0 0.0
        %738 = vmatpush2.msra.mxu0 0.0
        %739 = vmatprep.subr.mxu0 0.0
        %740 = vmatpush2.msra.mxu0 0.0
        %741 = vmatprep.subr.mxu0 0.0
        %742 = vmatpush2.msra.mxu0 0.0
        %743 = vmatprep.subr.mxu0 0.0
        %744 = vmatpush2.msra.mxu0 0.0
        %745 = vmatprep.subr.mxu0 0.0
        %746 = vmatpush2.msra.mxu0 0.0
        %747 = vmatprep.subr.mxu0 0.0
        %748 = vmatpush2.msra.mxu0 0.0
        %749 = vmatprep.subr.mxu0 0.0
        %750 = vmatpush2.msra.mxu0 0.0
        %751 = vmatprep.subr.mxu0 0.0
        %752 = vmatpush2.msra.mxu0 0.0
        %753 = vmatprep.subr.mxu0 0.0
        %754 = vmatpush2.msra.mxu0 0.0
        %755 = vmatprep.subr.mxu0 0.0
        %756 = vmatpush2.msra.mxu0 0.0
        %757 = vmatprep.subr.mxu0 0.0
        %758 = vmatpush2.msra.mxu0 0.0
        %759 = vmatprep.subr.mxu0 0.0
        %760 = vmatpush2.msra.mxu0 0.0
        %761 = vmatprep.subr.mxu0 0.0
        %762 = vmatpush2.msra.mxu0 0.0
        %763 = vmatprep.subr.mxu0 0.0
        %764 = vmatpush2.msra.mxu0 0.0
        %765 = vmatprep.subr.mxu0 0.0
        %766 = vmatpush2.msra.mxu0 0.0
        %767 = vmatprep.mubr.f32.mxu0 0.0
        %768 = vmatmul.mubr.f32.gmra.mxu0 %v701
        %v769 = vpop.f32.mrf.mxu0
        %v770 = vadd.f32 %v697, %v769
        %v771 = vpop.f32.mrf.mxu0
        %772 = vdwg.mxu0
        %v773 = vmul.f32 %v770, 0.35355338
        %v774 = vld [vmem:[%s586] sm:$0xff]
        %v775 = vld [vmem:[#allocation11] sm:$0xff]
        %v776 = vld [vmem:[#allocation11 + $0x8] sm:$0xff]
        %v777 = vld [vmem:[#allocation11 + $0x10] sm:$0xff]
        %v778 = vld [vmem:[#allocation11 + $0x18] sm:$0xff]
        %v779 = vld [vmem:[%s7] sm:$0x1]
        %v781 = vlaneseq
        %v782 = vshrl.u32 %v781, 7
        %v783 = vsub.s32 0, %v782
        %v784 = vrot.slane %v779, %v783
        %v787 = vsel %vm699, %v774, 0
        %789 = vmatprep.subr.mxu0 0.0
        %790 = vmatpush1.msra.mxu0 0.0
        %791 = vmatprep.subr.mxu0 0.0
        %792 = vmatpush1.msra.mxu0 0.0
        %793 = vmatprep.subr.mxu0 0.0
        %794 = vmatpush1.msra.mxu0 0.0
        %795 = vmatprep.subr.mxu0 0.0
        %796 = vmatpush1.msra.mxu0 0.0
        %797 = vmatprep.subr.mxu0 0.0
        %798 = vmatpush1.msra.mxu0 0.0
        %799 = vmatprep.subr.mxu0 0.0
        %800 = vmatpush1.msra.mxu0 0.0
        %801 = vmatprep.subr.mxu0 0.0
        %802 = vmatpush1.msra.mxu0 0.0
        %803 = vmatprep.subr.mxu0 0.0
        %804 = vmatpush1.msra.mxu0 0.0
        %805 = vmatprep.subr.mxu0 0.0
        %806 = vmatpush1.msra.mxu0 0.0
        %807 = vmatprep.subr.mxu0 0.0
        %808 = vmatpush1.msra.mxu0 0.0
        %809 = vmatprep.subr.mxu0 0.0
        %810 = vmatpush1.msra.mxu0 0.0
        %811 = vmatprep.subr.mxu0 0.0
        %812 = vmatpush1.msra.mxu0 0.0
        %813 = vmatprep.subr.mxu0 0.0
        %814 = vmatpush1.msra.mxu0 %v778
        %815 = vmatprep.subr.mxu0 0.0
        %816 = vmatpush1.msra.mxu0 %v777
        %817 = vmatprep.subr.mxu0 0.0
        %818 = vmatpush1.msra.mxu0 %v776
        %819 = vmatprep.subr.mxu0 0.0
        %820 = vmatpush1.msra.mxu0 %v775
        %821 = vmatprep.subr.mxu0 0.0
        %822 = vmatpush2.msra.mxu0 0.0
        %823 = vmatprep.subr.mxu0 0.0
        %824 = vmatpush2.msra.mxu0 0.0
        %825 = vmatprep.subr.mxu0 0.0
        %826 = vmatpush2.msra.mxu0 0.0
        %827 = vmatprep.subr.mxu0 0.0
        %828 = vmatpush2.msra.mxu0 0.0
        %829 = vmatprep.subr.mxu0 0.0
        %830 = vmatpush2.msra.mxu0 0.0
        %831 = vmatprep.subr.mxu0 0.0
        %832 = vmatpush2.msra.mxu0 0.0
        %833 = vmatprep.subr.mxu0 0.0
        %834 = vmatpush2.msra.mxu0 0.0
        %835 = vmatprep.subr.mxu0 0.0
        %836 = vmatpush2.msra.mxu0 0.0
        %837 = vmatprep.subr.mxu0 0.0
        %838 = vmatpush2.msra.mxu0 0.0
        %839 = vmatprep.subr.mxu0 0.0
        %840 = vmatpush2.msra.mxu0 0.0
        %841 = vmatprep.subr.mxu0 0.0
        %842 = vmatpush2.msra.mxu0 0.0
        %843 = vmatprep.subr.mxu0 0.0
        %844 = vmatpush2.msra.mxu0 0.0
        %845 = vmatprep.subr.mxu0 0.0
        %846 = vmatpush2.msra.mxu0 0.0
        %847 = vmatprep.subr.mxu0 0.0
        %848 = vmatpush2.msra.mxu0 0.0
        %849 = vmatprep.subr.mxu0 0.0
        %850 = vmatpush2.msra.mxu0 0.0
        %851 = vmatprep.subr.mxu0 0.0
        %852 = vmatpush2.msra.mxu0 0.0
        %853 = vmatprep.mubr.f32.mxu0 0.0
        %854 = vmatmul.mubr.f32.gmra.mxu0 %v787
        %v855 = vpop.f32.mrf.mxu0
        %v856 = vadd.f32 %v784, %v855
        %v857 = vpop.f32.mrf.mxu0
        %858 = vdwg.mxu0
        %v859 = vld [vmem:[%s595] sm:$0xff]
        %v860 = vld [vmem:[#allocation13] sm:$0xff]
        %v861 = vld [vmem:[#allocation13 + $0x8] sm:$0xff]
        %v862 = vld [vmem:[#allocation13 + $0x10] sm:$0xff]
        %v863 = vld [vmem:[#allocation13 + $0x18] sm:$0xff]
        %v864 = vld [vmem:[%s9] sm:$0x1]
        %v866 = vlaneseq
        %v867 = vshrl.u32 %v866, 7
        %v868 = vsub.s32 0, %v867
        %v869 = vrot.slane %v864, %v868
        %v872 = vsel %vm699, %v859, 0
        %874 = vmatprep.subr.mxu0 0.0
        %875 = vmatpush1.msra.mxu0 0.0
        %876 = vmatprep.subr.mxu0 0.0
        %877 = vmatpush1.msra.mxu0 0.0
        %878 = vmatprep.subr.mxu0 0.0
        %879 = vmatpush1.msra.mxu0 0.0
        %880 = vmatprep.subr.mxu0 0.0
        %881 = vmatpush1.msra.mxu0 0.0
        %882 = vmatprep.subr.mxu0 0.0
        %883 = vmatpush1.msra.mxu0 0.0
        %884 = vmatprep.subr.mxu0 0.0
        %885 = vmatpush1.msra.mxu0 0.0
        %886 = vmatprep.subr.mxu0 0.0
        %887 = vmatpush1.msra.mxu0 0.0
        %888 = vmatprep.subr.mxu0 0.0
        %889 = vmatpush1.msra.mxu0 0.0
        %890 = vmatprep.subr.mxu0 0.0
        %891 = vmatpush1.msra.mxu0 0.0
        %892 = vmatprep.subr.mxu0 0.0
        %893 = vmatpush1.msra.mxu0 0.0
        %894 = vmatprep.subr.mxu0 0.0
        %895 = vmatpush1.msra.mxu0 0.0
        %896 = vmatprep.subr.mxu0 0.0
        %897 = vmatpush1.msra.mxu0 0.0
        %898 = vmatprep.subr.mxu0 0.0
        %899 = vmatpush1.msra.mxu0 %v863
        %900 = vmatprep.subr.mxu0 0.0
        %901 = vmatpush1.msra.mxu0 %v862
        %902 = vmatprep.subr.mxu0 0.0
        %903 = vmatpush1.msra.mxu0 %v861
        %904 = vmatprep.subr.mxu0 0.0
        %905 = vmatpush1.msra.mxu0 %v860
        %906 = vmatprep.subr.mxu0 0.0
        %907 = vmatpush2.msra.mxu0 0.0
        %908 = vmatprep.subr.mxu0 0.0
        %909 = vmatpush2.msra.mxu0 0.0
        %910 = vmatprep.subr.mxu0 0.0
        %911 = vmatpush2.msra.mxu0 0.0
        %912 = vmatprep.subr.mxu0 0.0
        %913 = vmatpush2.msra.mxu0 0.0
        %914 = vmatprep.subr.mxu0 0.0
        %915 = vmatpush2.msra.mxu0 0.0
        %916 = vmatprep.subr.mxu0 0.0
        %917 = vmatpush2.msra.mxu0 0.0
        %918 = vmatprep.subr.mxu0 0.0
        %919 = vmatpush2.msra.mxu0 0.0
        %920 = vmatprep.subr.mxu0 0.0
        %921 = vmatpush2.msra.mxu0 0.0
        %922 = vmatprep.subr.mxu0 0.0
        %923 = vmatpush2.msra.mxu0 0.0
        %924 = vmatprep.subr.mxu0 0.0
        %925 = vmatpush2.msra.mxu0 0.0
        %926 = vmatprep.subr.mxu0 0.0
        %927 = vmatpush2.msra.mxu0 0.0
        %928 = vmatprep.subr.mxu0 0.0
        %929 = vmatpush2.msra.mxu0 0.0
        %930 = vmatprep.subr.mxu0 0.0
        %931 = vmatpush2.msra.mxu0 0.0
        %932 = vmatprep.subr.mxu0 0.0
        %933 = vmatpush2.msra.mxu0 0.0
        %934 = vmatprep.subr.mxu0 0.0
        %935 = vmatpush2.msra.mxu0 0.0
        %936 = vmatprep.subr.mxu0 0.0
        %937 = vmatpush2.msra.mxu0 0.0
        %938 = vmatprep.mubr.f32.mxu0 0.0
        %939 = vmatmul.mubr.f32.gmra.mxu0 %v872
        %v940 = vpop.f32.mrf.mxu0
        %v941 = vadd.f32 %v869, %v940
        %v942 = vpop.f32.mrf.mxu0
        %943 = vdwg.mxu0
        %v944 = vld [vmem:[%s604] sm:$0xff]
        %v945 = vld [vmem:[#allocation14] sm:$0xff]
        %v946 = vld [vmem:[#allocation14 + $0x8] sm:$0xff]
        %v947 = vld [vmem:[#allocation14 + $0x10] sm:$0xff]
        %v948 = vld [vmem:[#allocation14 + $0x18] sm:$0xff]
        %v949 = vld [vmem:[%s11] sm:$0x1]
        %v951 = vlaneseq
        %v952 = vshrl.u32 %v951, 7
        %v953 = vsub.s32 0, %v952
        %v954 = vrot.slane %v949, %v953
        %vm956 = vcmask 64512
        %v958 = vsel %vm956, %v773, 0
        %v961 = vsel %vm956, %v856, 0
        %963 = vmatprep.subr.mxu0 0.0
        %964 = vmatpush1.xpose.msra.mxu0 0.0
        %965 = vmatprep.subr.mxu0 0.0
        %966 = vmatpush1.xpose.msra.mxu0 0.0
        %967 = vmatprep.subr.mxu0 0.0
        %968 = vmatpush1.xpose.msra.mxu0 0.0
        %969 = vmatprep.subr.mxu0 0.0
        %970 = vmatpush1.xpose.msra.mxu0 0.0
        %971 = vmatprep.subr.mxu0 0.0
        %972 = vmatpush1.xpose.msra.mxu0 0.0
        %973 = vmatprep.subr.mxu0 0.0
        %974 = vmatpush1.xpose.msra.mxu0 0.0
        %975 = vmatprep.subr.mxu0 0.0
        %976 = vmatpush1.xpose.msra.mxu0 0.0
        %977 = vmatprep.subr.mxu0 0.0
        %978 = vmatpush1.xpose.msra.mxu0 0.0
        %979 = vmatprep.subr.mxu0 0.0
        %980 = vmatpush1.xpose.msra.mxu0 0.0
        %981 = vmatprep.subr.mxu0 0.0
        %982 = vmatpush1.xpose.msra.mxu0 0.0
        %983 = vmatprep.subr.mxu0 0.0
        %984 = vmatpush1.xpose.msra.mxu0 0.0
        %985 = vmatprep.subr.mxu0 0.0
        %986 = vmatpush1.xpose.msra.mxu0 0.0
        %987 = vmatprep.subr.mxu0 0.0
        %988 = vmatpush1.xpose.msra.mxu0 0.0
        %989 = vmatprep.subr.mxu0 0.0
        %990 = vmatpush1.xpose.msra.mxu0 0.0
        %991 = vmatprep.subr.mxu0 0.0
        %992 = vmatpush1.xpose.msra.mxu0 0.0
        %993 = vmatprep.subr.mxu0 0.0
        %994 = vmatpush1.xpose.msra.mxu0 %v961
        %995 = vmatprep.subr.mxu0 0.0
        %996 = vmatpush2.xpose.msra.mxu0 0.0
        %997 = vmatprep.subr.mxu0 0.0
        %998 = vmatpush2.xpose.msra.mxu0 0.0
        %999 = vmatprep.subr.mxu0 0.0
        %1000 = vmatpush2.xpose.msra.mxu0 0.0
        %1001 = vmatprep.subr.mxu0 0.0
        %1002 = vmatpush2.xpose.msra.mxu0 0.0
        %1003 = vmatprep.subr.mxu0 0.0
        %1004 = vmatpush2.xpose.msra.mxu0 0.0
        %1005 = vmatprep.subr.mxu0 0.0
        %1006 = vmatpush2.xpose.msra.mxu0 0.0
        %1007 = vmatprep.subr.mxu0 0.0
        %1008 = vmatpush2.xpose.msra.mxu0 0.0
        %1009 = vmatprep.subr.mxu0 0.0
        %1010 = vmatpush2.xpose.msra.mxu0 0.0
        %1011 = vmatprep.subr.mxu0 0.0
        %1012 = vmatpush2.xpose.msra.mxu0 0.0
        %1013 = vmatprep.subr.mxu0 0.0
        %1014 = vmatpush2.xpose.msra.mxu0 0.0
        %1015 = vmatprep.subr.mxu0 0.0
        %1016 = vmatpush2.xpose.msra.mxu0 0.0
        %1017 = vmatprep.subr.mxu0 0.0
        %1018 = vmatpush2.xpose.msra.mxu0 0.0
        %1019 = vmatprep.subr.mxu0 0.0
        %1020 = vmatpush2.xpose.msra.mxu0 0.0
        %1021 = vmatprep.subr.mxu0 0.0
        %1022 = vmatpush2.xpose.msra.mxu0 0.0
        %1023 = vmatprep.subr.mxu0 0.0
        %1024 = vmatpush2.xpose.msra.mxu0 0.0
        %1025 = vmatprep.subr.mxu0 0.0
        %1026 = vmatpush2.xpose.msra.mxu0 0.0
        %1027 = vmatprep.mubr.f32.mxu0 0.0
        %1028 = vmatmul.mubr.f32.gmra.mxu0 %v958
        %v1029 = vpop.f32.mrf.mxu0
        %v1030 = vadd.f32 %v944, %v1029
        %v1031 = vpop.f32.mrf.mxu0
        %1032 = vdwg.mxu0
        %v1033 = vsel %vm956, %v1030, -inf
        %1034 = vmax.xlane.f32.xlu0 %v1033
        %v1035 = vpop.xlane.xlu0 %1034
        %v1036 = vsub.f32 %v1030, %v1035
        %v1037 = vmul.f32 %v1036, 1.442695
        %v1038 = vpow.pop %v1037
        %v1039 = vsel %vm956, %v1038, 0.0
        %1040 = vadd.xlane.f32.xlu0 %v1039
        %v1041 = vpop.xlane.xlu0 %1040
        %v1042 = vrcp.pop %v1041
        %v1043 = vmul.f32 %v1038, %v1042
        %1044 = vst.msk [vmem:[%s686] sm:$0xff] %vm956, %v1043
        %v1046 = vsel %vm956, %v1043, 0
        %1048 = vmatprep.subr.mxu0 0.0
        %1049 = vmatpush1.msra.mxu0 0.0
        %1050 = vmatprep.subr.mxu0 0.0
        %1051 = vmatpush1.msra.mxu0 0.0
        %1052 = vmatprep.subr.mxu0 0.0
        %1053 = vmatpush1.msra.mxu0 0.0
        %1054 = vmatprep.subr.mxu0 0.0
        %1055 = vmatpush1.msra.mxu0 0.0
        %1056 = vmatprep.subr.mxu0 0.0
        %1057 = vmatpush1.msra.mxu0 0.0
        %1058 = vmatprep.subr.mxu0 0.0
        %1059 = vmatpush1.msra.mxu0 0.0
        %1060 = vmatprep.subr.mxu0 0.0
        %1061 = vmatpush1.msra.mxu0 0.0
        %1062 = vmatprep.subr.mxu0 0.0
        %1063 = vmatpush1.msra.mxu0 0.0
        %1064 = vmatprep.subr.mxu0 0.0
        %1065 = vmatpush1.msra.mxu0 0.0
        %1066 = vmatprep.subr.mxu0 0.0
        %1067 = vmatpush1.msra.mxu0 0.0
        %1068 = vmatprep.subr.mxu0 0.0
        %1069 = vmatpush1.msra.mxu0 0.0
        %1070 = vmatprep.subr.mxu0 0.0
        %1071 = vmatpush1.msra.mxu0 0.0
        %1072 = vmatprep.subr.mxu0 0.0
        %1073 = vmatpush1.msra.mxu0 0.0
        %1074 = vmatprep.subr.mxu0 0.0
        %1075 = vmatpush1.msra.mxu0 0.0
        %1076 = vmatprep.subr.mxu0 0.0
        %1077 = vmatpush1.msra.mxu0 0.0
        %1078 = vmatprep.subr.mxu0 0.0
        %1079 = vmatpush1.msra.mxu0 %v941
        %1080 = vmatprep.subr.mxu0 0.0
        %1081 = vmatpush2.msra.mxu0 0.0
        %1082 = vmatprep.subr.mxu0 0.0
        %1083 = vmatpush2.msra.mxu0 0.0
        %1084 = vmatprep.subr.mxu0 0.0
        %1085 = vmatpush2.msra.mxu0 0.0
        %1086 = vmatprep.subr.mxu0 0.0
        %1087 = vmatpush2.msra.mxu0 0.0
        %1088 = vmatprep.subr.mxu0 0.0
        %1089 = vmatpush2.msra.mxu0 0.0
        %1090 = vmatprep.subr.mxu0 0.0
        %1091 = vmatpush2.msra.mxu0 0.0
        %1092 = vmatprep.subr.mxu0 0.0
        %1093 = vmatpush2.msra.mxu0 0.0
        %1094 = vmatprep.subr.mxu0 0.0
        %1095 = vmatpush2.msra.mxu0 0.0
        %1096 = vmatprep.subr.mxu0 0.0
        %1097 = vmatpush2.msra.mxu0 0.0
        %1098 = vmatprep.subr.mxu0 0.0
        %1099 = vmatpush2.msra.mxu0 0.0
        %1100 = vmatprep.subr.mxu0 0.0
        %1101 = vmatpush2.msra.mxu0 0.0
        %1102 = vmatprep.subr.mxu0 0.0
        %1103 = vmatpush2.msra.mxu0 0.0
        %1104 = vmatprep.subr.mxu0 0.0
        %1105 = vmatpush2.msra.mxu0 0.0
        %1106 = vmatprep.subr.mxu0 0.0
        %1107 = vmatpush2.msra.mxu0 0.0
        %1108 = vmatprep.subr.mxu0 0.0
        %1109 = vmatpush2.msra.mxu0 0.0
        %1110 = vmatprep.subr.mxu0 0.0
        %1111 = vmatpush2.msra.mxu0 0.0
        %1112 = vmatprep.mubr.f32.mxu0 0.0
        %1113 = vmatmul.mubr.f32.gmra.mxu0 %v1046
        %v1114 = vpop.f32.mrf.mxu0
        %v1115 = vadd.f32 0.0, %v1114
        %v1116 = vpop.f32.mrf.mxu0
        %1117 = vdwg.mxu0
        %v1119 = vsel %vm956, %v1115, 0
        %1121 = vmatprep.subr.mxu0 0.0
        %1122 = vmatpush1.msra.mxu0 0.0
        %1123 = vmatprep.subr.mxu0 0.0
        %1124 = vmatpush1.msra.mxu0 0.0
        %1125 = vmatprep.subr.mxu0 0.0
        %1126 = vmatpush1.msra.mxu0 0.0
        %1127 = vmatprep.subr.mxu0 0.0
        %1128 = vmatpush1.msra.mxu0 0.0
        %1129 = vmatprep.subr.mxu0 0.0
        %1130 = vmatpush1.msra.mxu0 0.0
        %1131 = vmatprep.subr.mxu0 0.0
        %1132 = vmatpush1.msra.mxu0 0.0
        %1133 = vmatprep.subr.mxu0 0.0
        %1134 = vmatpush1.msra.mxu0 0.0
        %1135 = vmatprep.subr.mxu0 0.0
        %1136 = vmatpush1.msra.mxu0 0.0
        %1137 = vmatprep.subr.mxu0 0.0
        %1138 = vmatpush1.msra.mxu0 0.0
        %1139 = vmatprep.subr.mxu0 0.0
        %1140 = vmatpush1.msra.mxu0 0.0
        %1141 = vmatprep.subr.mxu0 0.0
        %1142 = vmatpush1.msra.mxu0 0.0
        %1143 = vmatprep.subr.mxu0 0.0
        %1144 = vmatpush1.msra.mxu0 0.0
        %1145 = vmatprep.subr.mxu0 0.0
        %1146 = vmatpush1.msra.mxu0 0.0
        %1147 = vmatprep.subr.mxu0 0.0
        %1148 = vmatpush1.msra.mxu0 0.0
        %1149 = vmatprep.subr.mxu0 0.0
        %1150 = vmatpush1.msra.mxu0 0.0
        %1151 = vmatprep.subr.mxu0 0.0
        %1152 = vmatpush1.msra.mxu0 %v945
        %1153 = vmatprep.subr.mxu0 0.0
        %1154 = vmatpush2.msra.mxu0 0.0
        %1155 = vmatprep.subr.mxu0 0.0
        %1156 = vmatpush2.msra.mxu0 0.0
        %1157 = vmatprep.subr.mxu0 0.0
        %1158 = vmatpush2.msra.mxu0 0.0
        %1159 = vmatprep.subr.mxu0 0.0
        %1160 = vmatpush2.msra.mxu0 0.0
        %1161 = vmatprep.subr.mxu0 0.0
        %1162 = vmatpush2.msra.mxu0 0.0
        %1163 = vmatprep.subr.mxu0 0.0
        %1164 = vmatpush2.msra.mxu0 0.0
        %1165 = vmatprep.subr.mxu0 0.0
        %1166 = vmatpush2.msra.mxu0 0.0
        %1167 = vmatprep.subr.mxu0 0.0
        %1168 = vmatpush2.msra.mxu0 0.0
        %1169 = vmatprep.subr.mxu0 0.0
        %1170 = vmatpush2.msra.mxu0 0.0
        %1171 = vmatprep.subr.mxu0 0.0
        %1172 = vmatpush2.msra.mxu0 0.0
        %1173 = vmatprep.subr.mxu0 0.0
        %1174 = vmatpush2.msra.mxu0 0.0
        %1175 = vmatprep.subr.mxu0 0.0
        %1176 = vmatpush2.msra.mxu0 0.0
        %1177 = vmatprep.subr.mxu0 0.0
        %1178 = vmatpush2.msra.mxu0 0.0
        %1179 = vmatprep.subr.mxu0 0.0
        %1180 = vmatpush2.msra.mxu0 0.0
        %1181 = vmatprep.subr.mxu0 0.0
        %1182 = vmatpush2.msra.mxu0 0.0
        %1183 = vmatprep.subr.mxu0 0.0
        %1184 = vmatpush2.msra.mxu0 0.0
        %1185 = vmatprep.mubr.f32.mxu0 0.0
        %1186 = vmatmul.mubr.f32.gmra.mxu0 %v1119
        %v1187 = vpop.f32.mrf.mxu0
        %v1188 = vadd.f32 0.0, %v1187
        %v1189 = vpop.f32.mrf.mxu0
        %1190 = vdwg.mxu0
        %v1191 = vadd.f32 %v954, %v1188
        %1192 = vrot.lane.b32.xlu0 %v773, 120
        %v1193 = vpop.permute.xlu0 %1192
        %1194 = vrot.lane.b32.xlu0 %v856, 120
        %v1195 = vpop.permute.xlu0 %1194
        %v1196 = vsel %vm956, %v1193, 0
        %v1198 = vsel %vm956, %v1195, 0
        %1200 = vmatprep.subr.mxu0 0.0
        %1201 = vmatpush1.xpose.msra.mxu0 0.0
        %1202 = vmatprep.subr.mxu0 0.0
        %1203 = vmatpush1.xpose.msra.mxu0 0.0
        %1204 = vmatprep.subr.mxu0 0.0
        %1205 = vmatpush1.xpose.msra.mxu0 0.0
        %1206 = vmatprep.subr.mxu0 0.0
        %1207 = vmatpush1.xpose.msra.mxu0 0.0
        %1208 = vmatprep.subr.mxu0 0.0
        %1209 = vmatpush1.xpose.msra.mxu0 0.0
        %1210 = vmatprep.subr.mxu0 0.0
        %1211 = vmatpush1.xpose.msra.mxu0 0.0
        %1212 = vmatprep.subr.mxu0 0.0
        %1213 = vmatpush1.xpose.msra.mxu0 0.0
        %1214 = vmatprep.subr.mxu0 0.0
        %1215 = vmatpush1.xpose.msra.mxu0 0.0
        %1216 = vmatprep.subr.mxu0 0.0
        %1217 = vmatpush1.xpose.msra.mxu0 0.0
        %1218 = vmatprep.subr.mxu0 0.0
        %1219 = vmatpush1.xpose.msra.mxu0 0.0
        %1220 = vmatprep.subr.mxu0 0.0
        %1221 = vmatpush1.xpose.msra.mxu0 0.0
        %1222 = vmatprep.subr.mxu0 0.0
        %1223 = vmatpush1.xpose.msra.mxu0 0.0
        %1224 = vmatprep.subr.mxu0 0.0
        %1225 = vmatpush1.xpose.msra.mxu0 0.0
        %1226 = vmatprep.subr.mxu0 0.0
        %1227 = vmatpush1.xpose.msra.mxu0 0.0
        %1228 = vmatprep.subr.mxu0 0.0
        %1229 = vmatpush1.xpose.msra.mxu0 0.0
        %1230 = vmatprep.subr.mxu0 0.0
        %1231 = vmatpush1.xpose.msra.mxu0 %v1198
        %1232 = vmatprep.subr.mxu0 0.0
        %1233 = vmatpush2.xpose.msra.mxu0 0.0
        %1234 = vmatprep.subr.mxu0 0.0
        %1235 = vmatpush2.xpose.msra.mxu0 0.0
        %1236 = vmatprep.subr.mxu0 0.0
        %1237 = vmatpush2.xpose.msra.mxu0 0.0
        %1238 = vmatprep.subr.mxu0 0.0
        %1239 = vmatpush2.xpose.msra.mxu0 0.0
        %1240 = vmatprep.subr.mxu0 0.0
        %1241 = vmatpush2.xpose.msra.mxu0 0.0
        %1242 = vmatprep.subr.mxu0 0.0
        %1243 = vmatpush2.xpose.msra.mxu0 0.0
        %1244 = vmatprep.subr.mxu0 0.0
        %1245 = vmatpush2.xpose.msra.mxu0 0.0
        %1246 = vmatprep.subr.mxu0 0.0
        %1247 = vmatpush2.xpose.msra.mxu0 0.0
        %1248 = vmatprep.subr.mxu0 0.0
        %1249 = vmatpush2.xpose.msra.mxu0 0.0
        %1250 = vmatprep.subr.mxu0 0.0
        %1251 = vmatpush2.xpose.msra.mxu0 0.0
        %1252 = vmatprep.subr.mxu0 0.0
        %1253 = vmatpush2.xpose.msra.mxu0 0.0
        %1254 = vmatprep.subr.mxu0 0.0
        %1255 = vmatpush2.xpose.msra.mxu0 0.0
        %1256 = vmatprep.subr.mxu0 0.0
        %1257 = vmatpush2.xpose.msra.mxu0 0.0
        %1258 = vmatprep.subr.mxu0 0.0
        %1259 = vmatpush2.xpose.msra.mxu0 0.0
        %1260 = vmatprep.subr.mxu0 0.0
        %1261 = vmatpush2.xpose.msra.mxu0 0.0
        %1262 = vmatprep.subr.mxu0 0.0
        %1263 = vmatpush2.xpose.msra.mxu0 0.0
        %1264 = vmatprep.mubr.f32.mxu0 0.0
        %1265 = vmatmul.mubr.f32.gmra.mxu0 %v1196
        %v1266 = vpop.f32.mrf.mxu0
        %v1267 = vadd.f32 %v944, %v1266
        %v1268 = vpop.f32.mrf.mxu0
        %1269 = vdwg.mxu0
        %v1270 = vsel %vm956, %v1267, -inf
        %1271 = vmax.xlane.f32.xlu0 %v1270
        %v1272 = vpop.xlane.xlu0 %1271
        %v1273 = vsub.f32 %v1267, %v1272
        %v1274 = vmul.f32 %v1273, 1.442695
        %v1275 = vpow.pop %v1274
        %v1276 = vsel %vm956, %v1275, 0.0
        %1277 = vadd.xlane.f32.xlu0 %v1276
        %v1278 = vpop.xlane.xlu0 %1277
        %v1279 = vrcp.pop %v1278
        %v1280 = vmul.f32 %v1275, %v1279
        %s1281 = scalar_lea.vmem %s686, 8 [#allocation17]
        %1282 = vst.msk [vmem:[%s1281] sm:$0xff] %vm956, %v1280
        %1284 = vrot.lane.b32.xlu0 %v941, 120
        %v1285 = vpop.permute.xlu0 %1284
        %v1288 = vsel %vm956, %v1280, 0
        %1290 = vmatprep.subr.mxu0 0.0
        %1291 = vmatpush1.msra.mxu0 0.0
        %1292 = vmatprep.subr.mxu0 0.0
        %1293 = vmatpush1.msra.mxu0 0.0
        %1294 = vmatprep.subr.mxu0 0.0
        %1295 = vmatpush1.msra.mxu0 0.0
        %1296 = vmatprep.subr.mxu0 0.0
        %1297 = vmatpush1.msra.mxu0 0.0
        %1298 = vmatprep.subr.mxu0 0.0
        %1299 = vmatpush1.msra.mxu0 0.0
        %1300 = vmatprep.subr.mxu0 0.0
        %1301 = vmatpush1.msra.mxu0 0.0
        %1302 = vmatprep.subr.mxu0 0.0
        %1303 = vmatpush1.msra.mxu0 0.0
        %1304 = vmatprep.subr.mxu0 0.0
        %1305 = vmatpush1.msra.mxu0 0.0
        %1306 = vmatprep.subr.mxu0 0.0
        %1307 = vmatpush1.msra.mxu0 0.0
        %1308 = vmatprep.subr.mxu0 0.0
        %1309 = vmatpush1.msra.mxu0 0.0
        %1310 = vmatprep.subr.mxu0 0.0
        %1311 = vmatpush1.msra.mxu0 0.0
        %1312 = vmatprep.subr.mxu0 0.0
        %1313 = vmatpush1.msra.mxu0 0.0
        %1314 = vmatprep.subr.mxu0 0.0
        %1315 = vmatpush1.msra.mxu0 0.0
        %1316 = vmatprep.subr.mxu0 0.0
        %1317 = vmatpush1.msra.mxu0 0.0
        %1318 = vmatprep.subr.mxu0 0.0
        %1319 = vmatpush1.msra.mxu0 0.0
        %1320 = vmatprep.subr.mxu0 0.0
        %1321 = vmatpush1.msra.mxu0 %v1285
        %1322 = vmatprep.subr.mxu0 0.0
        %1323 = vmatpush2.msra.mxu0 0.0
        %1324 = vmatprep.subr.mxu0 0.0
        %1325 = vmatpush2.msra.mxu0 0.0
        %1326 = vmatprep.subr.mxu0 0.0
        %1327 = vmatpush2.msra.mxu0 0.0
        %1328 = vmatprep.subr.mxu0 0.0
        %1329 = vmatpush2.msra.mxu0 0.0
        %1330 = vmatprep.subr.mxu0 0.0
        %1331 = vmatpush2.msra.mxu0 0.0
        %1332 = vmatprep.subr.mxu0 0.0
        %1333 = vmatpush2.msra.mxu0 0.0
        %1334 = vmatprep.subr.mxu0 0.0
        %1335 = vmatpush2.msra.mxu0 0.0
        %1336 = vmatprep.subr.mxu0 0.0
        %1337 = vmatpush2.msra.mxu0 0.0
        %1338 = vmatprep.subr.mxu0 0.0
        %1339 = vmatpush2.msra.mxu0 0.0
        %1340 = vmatprep.subr.mxu0 0.0
        %1341 = vmatpush2.msra.mxu0 0.0
        %1342 = vmatprep.subr.mxu0 0.0
        %1343 = vmatpush2.msra.mxu0 0.0
        %1344 = vmatprep.subr.mxu0 0.0
        %1345 = vmatpush2.msra.mxu0 0.0
        %1346 = vmatprep.subr.mxu0 0.0
        %1347 = vmatpush2.msra.mxu0 0.0
        %1348 = vmatprep.subr.mxu0 0.0
        %1349 = vmatpush2.msra.mxu0 0.0
        %1350 = vmatprep.subr.mxu0 0.0
        %1351 = vmatpush2.msra.mxu0 0.0
        %1352 = vmatprep.subr.mxu0 0.0
        %1353 = vmatpush2.msra.mxu0 0.0
        %1354 = vmatprep.mubr.f32.mxu0 0.0
        %1355 = vmatmul.mubr.f32.gmra.mxu0 %v1288
        %v1356 = vpop.f32.mrf.mxu0
        %v1357 = vadd.f32 0.0, %v1356
        %v1358 = vpop.f32.mrf.mxu0
        %1359 = vdwg.mxu0
        %v1361 = vsel %vm956, %v1357, 0
        %1363 = vmatprep.subr.mxu0 0.0
        %1364 = vmatpush1.msra.mxu0 0.0
        %1365 = vmatprep.subr.mxu0 0.0
        %1366 = vmatpush1.msra.mxu0 0.0
        %1367 = vmatprep.subr.mxu0 0.0
        %1368 = vmatpush1.msra.mxu0 0.0
        %1369 = vmatprep.subr.mxu0 0.0
        %1370 = vmatpush1.msra.mxu0 0.0
        %1371 = vmatprep.subr.mxu0 0.0
        %1372 = vmatpush1.msra.mxu0 0.0
        %1373 = vmatprep.subr.mxu0 0.0
        %1374 = vmatpush1.msra.mxu0 0.0
        %1375 = vmatprep.subr.mxu0 0.0
        %1376 = vmatpush1.msra.mxu0 0.0
        %1377 = vmatprep.subr.mxu0 0.0
        %1378 = vmatpush1.msra.mxu0 0.0
        %1379 = vmatprep.subr.mxu0 0.0
        %1380 = vmatpush1.msra.mxu0 0.0
        %1381 = vmatprep.subr.mxu0 0.0
        %1382 = vmatpush1.msra.mxu0 0.0
        %1383 = vmatprep.subr.mxu0 0.0
        %1384 = vmatpush1.msra.mxu0 0.0
        %1385 = vmatprep.subr.mxu0 0.0
        %1386 = vmatpush1.msra.mxu0 0.0
        %1387 = vmatprep.subr.mxu0 0.0
        %1388 = vmatpush1.msra.mxu0 0.0
        %1389 = vmatprep.subr.mxu0 0.0
        %1390 = vmatpush1.msra.mxu0 0.0
        %1391 = vmatprep.subr.mxu0 0.0
        %1392 = vmatpush1.msra.mxu0 0.0
        %1393 = vmatprep.subr.mxu0 0.0
        %1394 = vmatpush1.msra.mxu0 %v946
        %1395 = vmatprep.subr.mxu0 0.0
        %1396 = vmatpush2.msra.mxu0 0.0
        %1397 = vmatprep.subr.mxu0 0.0
        %1398 = vmatpush2.msra.mxu0 0.0
        %1399 = vmatprep.subr.mxu0 0.0
        %1400 = vmatpush2.msra.mxu0 0.0
        %1401 = vmatprep.subr.mxu0 0.0
        %1402 = vmatpush2.msra.mxu0 0.0
        %1403 = vmatprep.subr.mxu0 0.0
        %1404 = vmatpush2.msra.mxu0 0.0
        %1405 = vmatprep.subr.mxu0 0.0
        %1406 = vmatpush2.msra.mxu0 0.0
        %1407 = vmatprep.subr.mxu0 0.0
        %1408 = vmatpush2.msra.mxu0 0.0
        %1409 = vmatprep.subr.mxu0 0.0
        %1410 = vmatpush2.msra.mxu0 0.0
        %1411 = vmatprep.subr.mxu0 0.0
        %1412 = vmatpush2.msra.mxu0 0.0
        %1413 = vmatprep.subr.mxu0 0.0
        %1414 = vmatpush2.msra.mxu0 0.0
        %1415 = vmatprep.subr.mxu0 0.0
        %1416 = vmatpush2.msra.mxu0 0.0
        %1417 = vmatprep.subr.mxu0 0.0
        %1418 = vmatpush2.msra.mxu0 0.0
        %1419 = vmatprep.subr.mxu0 0.0
        %1420 = vmatpush2.msra.mxu0 0.0
        %1421 = vmatprep.subr.mxu0 0.0
        %1422 = vmatpush2.msra.mxu0 0.0
        %1423 = vmatprep.subr.mxu0 0.0
        %1424 = vmatpush2.msra.mxu0 0.0
        %1425 = vmatprep.subr.mxu0 0.0
        %1426 = vmatpush2.msra.mxu0 0.0
        %1427 = vmatprep.mubr.f32.mxu0 0.0
        %1428 = vmatmul.mubr.f32.gmra.mxu0 %v1361
        %v1429 = vpop.f32.mrf.mxu0
        %v1430 = vadd.f32 0.0, %v1429
        %v1431 = vpop.f32.mrf.mxu0
        %1432 = vdwg.mxu0
        %v1433 = vadd.f32 %v1191, %v1430
        %1434 = vrot.lane.b32.xlu0 %v773, 112
        %v1435 = vpop.permute.xlu0 %1434
        %1436 = vrot.lane.b32.xlu0 %v856, 112
        %v1437 = vpop.permute.xlu0 %1436
        %v1438 = vsel %vm956, %v1435, 0
        %v1440 = vsel %vm956, %v1437, 0
        %1442 = vmatprep.subr.mxu0 0.0
        %1443 = vmatpush1.xpose.msra.mxu0 0.0
        %1444 = vmatprep.subr.mxu0 0.0
        %1445 = vmatpush1.xpose.msra.mxu0 0.0
        %1446 = vmatprep.subr.mxu0 0.0
        %1447 = vmatpush1.xpose.msra.mxu0 0.0
        %1448 = vmatprep.subr.mxu0 0.0
        %1449 = vmatpush1.xpose.msra.mxu0 0.0
        %1450 = vmatprep.subr.mxu0 0.0
        %1451 = vmatpush1.xpose.msra.mxu0 0.0
        %1452 = vmatprep.subr.mxu0 0.0
        %1453 = vmatpush1.xpose.msra.mxu0 0.0
        %1454 = vmatprep.subr.mxu0 0.0
        %1455 = vmatpush1.xpose.msra.mxu0 0.0
        %1456 = vmatprep.subr.mxu0 0.0
        %1457 = vmatpush1.xpose.msra.mxu0 0.0
        %1458 = vmatprep.subr.mxu0 0.0
        %1459 = vmatpush1.xpose.msra.mxu0 0.0
        %1460 = vmatprep.subr.mxu0 0.0
        %1461 = vmatpush1.xpose.msra.mxu0 0.0
        %1462 = vmatprep.subr.mxu0 0.0
        %1463 = vmatpush1.xpose.msra.mxu0 0.0
        %1464 = vmatprep.subr.mxu0 0.0
        %1465 = vmatpush1.xpose.msra.mxu0 0.0
        %1466 = vmatprep.subr.mxu0 0.0
        %1467 = vmatpush1.xpose.msra.mxu0 0.0
        %1468 = vmatprep.subr.mxu0 0.0
        %1469 = vmatpush1.xpose.msra.mxu0 0.0
        %1470 = vmatprep.subr.mxu0 0.0
        %1471 = vmatpush1.xpose.msra.mxu0 0.0
        %1472 = vmatprep.subr.mxu0 0.0
        %1473 = vmatpush1.xpose.msra.mxu0 %v1440
        %1474 = vmatprep.subr.mxu0 0.0
        %1475 = vmatpush2.xpose.msra.mxu0 0.0
        %1476 = vmatprep.subr.mxu0 0.0
        %1477 = vmatpush2.xpose.msra.mxu0 0.0
        %1478 = vmatprep.subr.mxu0 0.0
        %1479 = vmatpush2.xpose.msra.mxu0 0.0
        %1480 = vmatprep.subr.mxu0 0.0
        %1481 = vmatpush2.xpose.msra.mxu0 0.0
        %1482 = vmatprep.subr.mxu0 0.0
        %1483 = vmatpush2.xpose.msra.mxu0 0.0
        %1484 = vmatprep.subr.mxu0 0.0
        %1485 = vmatpush2.xpose.msra.mxu0 0.0
        %1486 = vmatprep.subr.mxu0 0.0
        %1487 = vmatpush2.xpose.msra.mxu0 0.0
        %1488 = vmatprep.subr.mxu0 0.0
        %1489 = vmatpush2.xpose.msra.mxu0 0.0
        %1490 = vmatprep.subr.mxu0 0.0
        %1491 = vmatpush2.xpose.msra.mxu0 0.0
        %1492 = vmatprep.subr.mxu0 0.0
        %1493 = vmatpush2.xpose.msra.mxu0 0.0
        %1494 = vmatprep.subr.mxu0 0.0
        %1495 = vmatpush2.xpose.msra.mxu0 0.0
        %1496 = vmatprep.subr.mxu0 0.0
        %1497 = vmatpush2.xpose.msra.mxu0 0.0
        %1498 = vmatprep.subr.mxu0 0.0
        %1499 = vmatpush2.xpose.msra.mxu0 0.0
        %1500 = vmatprep.subr.mxu0 0.0
        %1501 = vmatpush2.xpose.msra.mxu0 0.0
        %1502 = vmatprep.subr.mxu0 0.0
        %1503 = vmatpush2.xpose.msra.mxu0 0.0
        %1504 = vmatprep.subr.mxu0 0.0
        %1505 = vmatpush2.xpose.msra.mxu0 0.0
        %1506 = vmatprep.mubr.f32.mxu0 0.0
        %1507 = vmatmul.mubr.f32.gmra.mxu0 %v1438
        %v1508 = vpop.f32.mrf.mxu0
        %v1509 = vadd.f32 %v944, %v1508
        %v1510 = vpop.f32.mrf.mxu0
        %1511 = vdwg.mxu0
        %v1512 = vsel %vm956, %v1509, -inf
        %1513 = vmax.xlane.f32.xlu0 %v1512
        %v1514 = vpop.xlane.xlu0 %1513
        %v1515 = vsub.f32 %v1509, %v1514
        %v1516 = vmul.f32 %v1515, 1.442695
        %v1517 = vpow.pop %v1516
        %v1518 = vsel %vm956, %v1517, 0.0
        %1519 = vadd.xlane.f32.xlu0 %v1518
        %v1520 = vpop.xlane.xlu0 %1519
        %v1521 = vrcp.pop %v1520
        %v1522 = vmul.f32 %v1517, %v1521
        %s1523 = scalar_lea.vmem %s686, 16 [#allocation17]
        %1524 = vst.msk [vmem:[%s1523] sm:$0xff] %vm956, %v1522
        %1525 = vrot.lane.b32.xlu0 %v941, 112
        %v1526 = vpop.permute.xlu0 %1525
        %v1529 = vsel %vm956, %v1522, 0
        %1531 = vmatprep.subr.mxu0 0.0
        %1532 = vmatpush1.msra.mxu0 0.0
        %1533 = vmatprep.subr.mxu0 0.0
        %1534 = vmatpush1.msra.mxu0 0.0
        %1535 = vmatprep.subr.mxu0 0.0
        %1536 = vmatpush1.msra.mxu0 0.0
        %1537 = vmatprep.subr.mxu0 0.0
        %1538 = vmatpush1.msra.mxu0 0.0
        %1539 = vmatprep.subr.mxu0 0.0
        %1540 = vmatpush1.msra.mxu0 0.0
        %1541 = vmatprep.subr.mxu0 0.0
        %1542 = vmatpush1.msra.mxu0 0.0
        %1543 = vmatprep.subr.mxu0 0.0
        %1544 = vmatpush1.msra.mxu0 0.0
        %1545 = vmatprep.subr.mxu0 0.0
        %1546 = vmatpush1.msra.mxu0 0.0
        %1547 = vmatprep.subr.mxu0 0.0
        %1548 = vmatpush1.msra.mxu0 0.0
        %1549 = vmatprep.subr.mxu0 0.0
        %1550 = vmatpush1.msra.mxu0 0.0
        %1551 = vmatprep.subr.mxu0 0.0
        %1552 = vmatpush1.msra.mxu0 0.0
        %1553 = vmatprep.subr.mxu0 0.0
        %1554 = vmatpush1.msra.mxu0 0.0
        %1555 = vmatprep.subr.mxu0 0.0
        %1556 = vmatpush1.msra.mxu0 0.0
        %1557 = vmatprep.subr.mxu0 0.0
        %1558 = vmatpush1.msra.mxu0 0.0
        %1559 = vmatprep.subr.mxu0 0.0
        %1560 = vmatpush1.msra.mxu0 0.0
        %1561 = vmatprep.subr.mxu0 0.0
        %1562 = vmatpush1.msra.mxu0 %v1526
        %1563 = vmatprep.subr.mxu0 0.0
        %1564 = vmatpush2.msra.mxu0 0.0
        %1565 = vmatprep.subr.mxu0 0.0
        %1566 = vmatpush2.msra.mxu0 0.0
        %1567 = vmatprep.subr.mxu0 0.0
        %1568 = vmatpush2.msra.mxu0 0.0
        %1569 = vmatprep.subr.mxu0 0.0
        %1570 = vmatpush2.msra.mxu0 0.0
        %1571 = vmatprep.subr.mxu0 0.0
        %1572 = vmatpush2.msra.mxu0 0.0
        %1573 = vmatprep.subr.mxu0 0.0
        %1574 = vmatpush2.msra.mxu0 0.0
        %1575 = vmatprep.subr.mxu0 0.0
        %1576 = vmatpush2.msra.mxu0 0.0
        %1577 = vmatprep.subr.mxu0 0.0
        %1578 = vmatpush2.msra.mxu0 0.0
        %1579 = vmatprep.subr.mxu0 0.0
        %1580 = vmatpush2.msra.mxu0 0.0
        %1581 = vmatprep.subr.mxu0 0.0
        %1582 = vmatpush2.msra.mxu0 0.0
        %1583 = vmatprep.subr.mxu0 0.0
        %1584 = vmatpush2.msra.mxu0 0.0
        %1585 = vmatprep.subr.mxu0 0.0
        %1586 = vmatpush2.msra.mxu0 0.0
        %1587 = vmatprep.subr.mxu0 0.0
        %1588 = vmatpush2.msra.mxu0 0.0
        %1589 = vmatprep.subr.mxu0 0.0
        %1590 = vmatpush2.msra.mxu0 0.0
        %1591 = vmatprep.subr.mxu0 0.0
        %1592 = vmatpush2.msra.mxu0 0.0
        %1593 = vmatprep.subr.mxu0 0.0
        %1594 = vmatpush2.msra.mxu0 0.0
        %1595 = vmatprep.mubr.f32.mxu0 0.0
        %1596 = vmatmul.mubr.f32.gmra.mxu0 %v1529
        %v1597 = vpop.f32.mrf.mxu0
        %v1598 = vadd.f32 0.0, %v1597
        %v1599 = vpop.f32.mrf.mxu0
        %1600 = vdwg.mxu0
        %v1602 = vsel %vm956, %v1598, 0
        %1604 = vmatprep.subr.mxu0 0.0
        %1605 = vmatpush1.msra.mxu0 0.0
        %1606 = vmatprep.subr.mxu0 0.0
        %1607 = vmatpush1.msra.mxu0 0.0
        %1608 = vmatprep.subr.mxu0 0.0
        %1609 = vmatpush1.msra.mxu0 0.0
        %1610 = vmatprep.subr.mxu0 0.0
        %1611 = vmatpush1.msra.mxu0 0.0
        %1612 = vmatprep.subr.mxu0 0.0
        %1613 = vmatpush1.msra.mxu0 0.0
        %1614 = vmatprep.subr.mxu0 0.0
        %1615 = vmatpush1.msra.mxu0 0.0
        %1616 = vmatprep.subr.mxu0 0.0
        %1617 = vmatpush1.msra.mxu0 0.0
        %1618 = vmatprep.subr.mxu0 0.0
        %1619 = vmatpush1.msra.mxu0 0.0
        %1620 = vmatprep.subr.mxu0 0.0
        %1621 = vmatpush1.msra.mxu0 0.0
        %1622 = vmatprep.subr.mxu0 0.0
        %1623 = vmatpush1.msra.mxu0 0.0
        %1624 = vmatprep.subr.mxu0 0.0
        %1625 = vmatpush1.msra.mxu0 0.0
        %1626 = vmatprep.subr.mxu0 0.0
        %1627 = vmatpush1.msra.mxu0 0.0
        %1628 = vmatprep.subr.mxu0 0.0
        %1629 = vmatpush1.msra.mxu0 0.0
        %1630 = vmatprep.subr.mxu0 0.0
        %1631 = vmatpush1.msra.mxu0 0.0
        %1632 = vmatprep.subr.mxu0 0.0
        %1633 = vmatpush1.msra.mxu0 0.0
        %1634 = vmatprep.subr.mxu0 0.0
        %1635 = vmatpush1.msra.mxu0 %v947
        %1636 = vmatprep.subr.mxu0 0.0
        %1637 = vmatpush2.msra.mxu0 0.0
        %1638 = vmatprep.subr.mxu0 0.0
        %1639 = vmatpush2.msra.mxu0 0.0
        %1640 = vmatprep.subr.mxu0 0.0
        %1641 = vmatpush2.msra.mxu0 0.0
        %1642 = vmatprep.subr.mxu0 0.0
        %1643 = vmatpush2.msra.mxu0 0.0
        %1644 = vmatprep.subr.mxu0 0.0
        %1645 = vmatpush2.msra.mxu0 0.0
        %1646 = vmatprep.subr.mxu0 0.0
        %1647 = vmatpush2.msra.mxu0 0.0
        %1648 = vmatprep.subr.mxu0 0.0
        %1649 = vmatpush2.msra.mxu0 0.0
        %1650 = vmatprep.subr.mxu0 0.0
        %1651 = vmatpush2.msra.mxu0 0.0
        %1652 = vmatprep.subr.mxu0 0.0
        %1653 = vmatpush2.msra.mxu0 0.0
        %1654 = vmatprep.subr.mxu0 0.0
        %1655 = vmatpush2.msra.mxu0 0.0
        %1656 = vmatprep.subr.mxu0 0.0
        %1657 = vmatpush2.msra.mxu0 0.0
        %1658 = vmatprep.subr.mxu0 0.0
        %1659 = vmatpush2.msra.mxu0 0.0
        %1660 = vmatprep.subr.mxu0 0.0
        %1661 = vmatpush2.msra.mxu0 0.0
        %1662 = vmatprep.subr.mxu0 0.0
        %1663 = vmatpush2.msra.mxu0 0.0
        %1664 = vmatprep.subr.mxu0 0.0
        %1665 = vmatpush2.msra.mxu0 0.0
        %1666 = vmatprep.subr.mxu0 0.0
        %1667 = vmatpush2.msra.mxu0 0.0
        %1668 = vmatprep.mubr.f32.mxu0 0.0
        %1669 = vmatmul.mubr.f32.gmra.mxu0 %v1602
        %v1670 = vpop.f32.mrf.mxu0
        %v1671 = vadd.f32 0.0, %v1670
        %v1672 = vpop.f32.mrf.mxu0
        %1673 = vdwg.mxu0
        %v1674 = vadd.f32 %v1433, %v1671
        %1675 = vrot.lane.b32.xlu0 %v773, 104
        %v1676 = vpop.permute.xlu0 %1675
        %1677 = vrot.lane.b32.xlu0 %v856, 104
        %v1678 = vpop.permute.xlu0 %1677
        %v1679 = vsel %vm956, %v1676, 0
        %v1681 = vsel %vm956, %v1678, 0
        %1683 = vmatprep.subr.mxu0 0.0
        %1684 = vmatpush1.xpose.msra.mxu0 0.0
        %1685 = vmatprep.subr.mxu0 0.0
        %1686 = vmatpush1.xpose.msra.mxu0 0.0
        %1687 = vmatprep.subr.mxu0 0.0
        %1688 = vmatpush1.xpose.msra.mxu0 0.0
        %1689 = vmatprep.subr.mxu0 0.0
        %1690 = vmatpush1.xpose.msra.mxu0 0.0
        %1691 = vmatprep.subr.mxu0 0.0
        %1692 = vmatpush1.xpose.msra.mxu0 0.0
        %1693 = vmatprep.subr.mxu0 0.0
        %1694 = vmatpush1.xpose.msra.mxu0 0.0
        %1695 = vmatprep.subr.mxu0 0.0
        %1696 = vmatpush1.xpose.msra.mxu0 0.0
        %1697 = vmatprep.subr.mxu0 0.0
        %1698 = vmatpush1.xpose.msra.mxu0 0.0
        %1699 = vmatprep.subr.mxu0 0.0
        %1700 = vmatpush1.xpose.msra.mxu0 0.0
        %1701 = vmatprep.subr.mxu0 0.0
        %1702 = vmatpush1.xpose.msra.mxu0 0.0
        %1703 = vmatprep.subr.mxu0 0.0
        %1704 = vmatpush1.xpose.msra.mxu0 0.0
        %1705 = vmatprep.subr.mxu0 0.0
        %1706 = vmatpush1.xpose.msra.mxu0 0.0
        %1707 = vmatprep.subr.mxu0 0.0
        %1708 = vmatpush1.xpose.msra.mxu0 0.0
        %1709 = vmatprep.subr.mxu0 0.0
        %1710 = vmatpush1.xpose.msra.mxu0 0.0
        %1711 = vmatprep.subr.mxu0 0.0
        %1712 = vmatpush1.xpose.msra.mxu0 0.0
        %1713 = vmatprep.subr.mxu0 0.0
        %1714 = vmatpush1.xpose.msra.mxu0 %v1681
        %1715 = vmatprep.subr.mxu0 0.0
        %1716 = vmatpush2.xpose.msra.mxu0 0.0
        %1717 = vmatprep.subr.mxu0 0.0
        %1718 = vmatpush2.xpose.msra.mxu0 0.0
        %1719 = vmatprep.subr.mxu0 0.0
        %1720 = vmatpush2.xpose.msra.mxu0 0.0
        %1721 = vmatprep.subr.mxu0 0.0
        %1722 = vmatpush2.xpose.msra.mxu0 0.0
        %1723 = vmatprep.subr.mxu0 0.0
        %1724 = vmatpush2.xpose.msra.mxu0 0.0
        %1725 = vmatprep.subr.mxu0 0.0
        %1726 = vmatpush2.xpose.msra.mxu0 0.0
        %1727 = vmatprep.subr.mxu0 0.0
        %1728 = vmatpush2.xpose.msra.mxu0 0.0
        %1729 = vmatprep.subr.mxu0 0.0
        %1730 = vmatpush2.xpose.msra.mxu0 0.0
        %1731 = vmatprep.subr.mxu0 0.0
        %1732 = vmatpush2.xpose.msra.mxu0 0.0
        %1733 = vmatprep.subr.mxu0 0.0
        %1734 = vmatpush2.xpose.msra.mxu0 0.0
        %1735 = vmatprep.subr.mxu0 0.0
        %1736 = vmatpush2.xpose.msra.mxu0 0.0
        %1737 = vmatprep.subr.mxu0 0.0
        %1738 = vmatpush2.xpose.msra.mxu0 0.0
        %1739 = vmatprep.subr.mxu0 0.0
        %1740 = vmatpush2.xpose.msra.mxu0 0.0
        %1741 = vmatprep.subr.mxu0 0.0
        %1742 = vmatpush2.xpose.msra.mxu0 0.0
        %1743 = vmatprep.subr.mxu0 0.0
        %1744 = vmatpush2.xpose.msra.mxu0 0.0
        %1745 = vmatprep.subr.mxu0 0.0
        %1746 = vmatpush2.xpose.msra.mxu0 0.0
        %1747 = vmatprep.mubr.f32.mxu0 0.0
        %1748 = vmatmul.mubr.f32.gmra.mxu0 %v1679
        %v1749 = vpop.f32.mrf.mxu0
        %v1750 = vadd.f32 %v944, %v1749
        %v1751 = vpop.f32.mrf.mxu0
        %1752 = vdwg.mxu0
        %v1753 = vsel %vm956, %v1750, -inf
        %1754 = vmax.xlane.f32.xlu0 %v1753
        %v1755 = vpop.xlane.xlu0 %1754
        %v1756 = vsub.f32 %v1750, %v1755
        %v1757 = vmul.f32 %v1756, 1.442695
        %v1758 = vpow.pop %v1757
        %v1759 = vsel %vm956, %v1758, 0.0
        %1760 = vadd.xlane.f32.xlu0 %v1759
        %v1761 = vpop.xlane.xlu0 %1760
        %v1762 = vrcp.pop %v1761
        %v1763 = vmul.f32 %v1758, %v1762
        %s1764 = scalar_lea.vmem %s686, 24 [#allocation17]
        %1765 = vst.msk [vmem:[%s1764] sm:$0xff] %vm956, %v1763
        %1766 = vrot.lane.b32.xlu0 %v941, 104
        %v1767 = vpop.permute.xlu0 %1766
        %v1770 = vsel %vm956, %v1763, 0
        %1772 = vmatprep.subr.mxu0 0.0
        %1773 = vmatpush1.msra.mxu0 0.0
        %1774 = vmatprep.subr.mxu0 0.0
        %1775 = vmatpush1.msra.mxu0 0.0
        %1776 = vmatprep.subr.mxu0 0.0
        %1777 = vmatpush1.msra.mxu0 0.0
        %1778 = vmatprep.subr.mxu0 0.0
        %1779 = vmatpush1.msra.mxu0 0.0
        %1780 = vmatprep.subr.mxu0 0.0
        %1781 = vmatpush1.msra.mxu0 0.0
        %1782 = vmatprep.subr.mxu0 0.0
        %1783 = vmatpush1.msra.mxu0 0.0
        %1784 = vmatprep.subr.mxu0 0.0
        %1785 = vmatpush1.msra.mxu0 0.0
        %1786 = vmatprep.subr.mxu0 0.0
        %1787 = vmatpush1.msra.mxu0 0.0
        %1788 = vmatprep.subr.mxu0 0.0
        %1789 = vmatpush1.msra.mxu0 0.0
        %1790 = vmatprep.subr.mxu0 0.0
        %1791 = vmatpush1.msra.mxu0 0.0
        %1792 = vmatprep.subr.mxu0 0.0
        %1793 = vmatpush1.msra.mxu0 0.0
        %1794 = vmatprep.subr.mxu0 0.0
        %1795 = vmatpush1.msra.mxu0 0.0
        %1796 = vmatprep.subr.mxu0 0.0
        %1797 = vmatpush1.msra.mxu0 0.0
        %1798 = vmatprep.subr.mxu0 0.0
        %1799 = vmatpush1.msra.mxu0 0.0
        %1800 = vmatprep.subr.mxu0 0.0
        %1801 = vmatpush1.msra.mxu0 0.0
        %1802 = vmatprep.subr.mxu0 0.0
        %1803 = vmatpush1.msra.mxu0 %v1767
        %1804 = vmatprep.subr.mxu0 0.0
        %1805 = vmatpush2.msra.mxu0 0.0
        %1806 = vmatprep.subr.mxu0 0.0
        %1807 = vmatpush2.msra.mxu0 0.0
        %1808 = vmatprep.subr.mxu0 0.0
        %1809 = vmatpush2.msra.mxu0 0.0
        %1810 = vmatprep.subr.mxu0 0.0
        %1811 = vmatpush2.msra.mxu0 0.0
        %1812 = vmatprep.subr.mxu0 0.0
        %1813 = vmatpush2.msra.mxu0 0.0
        %1814 = vmatprep.subr.mxu0 0.0
        %1815 = vmatpush2.msra.mxu0 0.0
        %1816 = vmatprep.subr.mxu0 0.0
        %1817 = vmatpush2.msra.mxu0 0.0
        %1818 = vmatprep.subr.mxu0 0.0
        %1819 = vmatpush2.msra.mxu0 0.0
        %1820 = vmatprep.subr.mxu0 0.0
        %1821 = vmatpush2.msra.mxu0 0.0
        %1822 = vmatprep.subr.mxu0 0.0
        %1823 = vmatpush2.msra.mxu0 0.0
        %1824 = vmatprep.subr.mxu0 0.0
        %1825 = vmatpush2.msra.mxu0 0.0
        %1826 = vmatprep.subr.mxu0 0.0
        %1827 = vmatpush2.msra.mxu0 0.0
        %1828 = vmatprep.subr.mxu0 0.0
        %1829 = vmatpush2.msra.mxu0 0.0
        %1830 = vmatprep.subr.mxu0 0.0
        %1831 = vmatpush2.msra.mxu0 0.0
        %1832 = vmatprep.subr.mxu0 0.0
        %1833 = vmatpush2.msra.mxu0 0.0
        %1834 = vmatprep.subr.mxu0 0.0
        %1835 = vmatpush2.msra.mxu0 0.0
        %1836 = vmatprep.mubr.f32.mxu0 0.0
        %1837 = vmatmul.mubr.f32.gmra.mxu0 %v1770
        %v1838 = vpop.f32.mrf.mxu0
        %v1839 = vadd.f32 0.0, %v1838
        %v1840 = vpop.f32.mrf.mxu0
        %1841 = vdwg.mxu0
        %v1843 = vsel %vm956, %v1839, 0
        %1845 = vmatprep.subr.mxu0 0.0
        %1846 = vmatpush1.msra.mxu0 0.0
        %1847 = vmatprep.subr.mxu0 0.0
        %1848 = vmatpush1.msra.mxu0 0.0
        %1849 = vmatprep.subr.mxu0 0.0
        %1850 = vmatpush1.msra.mxu0 0.0
        %1851 = vmatprep.subr.mxu0 0.0
        %1852 = vmatpush1.msra.mxu0 0.0
        %1853 = vmatprep.subr.mxu0 0.0
        %1854 = vmatpush1.msra.mxu0 0.0
        %1855 = vmatprep.subr.mxu0 0.0
        %1856 = vmatpush1.msra.mxu0 0.0
        %1857 = vmatprep.subr.mxu0 0.0
        %1858 = vmatpush1.msra.mxu0 0.0
        %1859 = vmatprep.subr.mxu0 0.0
        %1860 = vmatpush1.msra.mxu0 0.0
        %1861 = vmatprep.subr.mxu0 0.0
        %1862 = vmatpush1.msra.mxu0 0.0
        %1863 = vmatprep.subr.mxu0 0.0
        %1864 = vmatpush1.msra.mxu0 0.0
        %1865 = vmatprep.subr.mxu0 0.0
        %1866 = vmatpush1.msra.mxu0 0.0
        %1867 = vmatprep.subr.mxu0 0.0
        %1868 = vmatpush1.msra.mxu0 0.0
        %1869 = vmatprep.subr.mxu0 0.0
        %1870 = vmatpush1.msra.mxu0 0.0
        %1871 = vmatprep.subr.mxu0 0.0
        %1872 = vmatpush1.msra.mxu0 0.0
        %1873 = vmatprep.subr.mxu0 0.0
        %1874 = vmatpush1.msra.mxu0 0.0
        %1875 = vmatprep.subr.mxu0 0.0
        %1876 = vmatpush1.msra.mxu0 %v948
        %1877 = vmatprep.subr.mxu0 0.0
        %1878 = vmatpush2.msra.mxu0 0.0
        %1879 = vmatprep.subr.mxu0 0.0
        %1880 = vmatpush2.msra.mxu0 0.0
        %1881 = vmatprep.subr.mxu0 0.0
        %1882 = vmatpush2.msra.mxu0 0.0
        %1883 = vmatprep.subr.mxu0 0.0
        %1884 = vmatpush2.msra.mxu0 0.0
        %1885 = vmatprep.subr.mxu0 0.0
        %1886 = vmatpush2.msra.mxu0 0.0
        %1887 = vmatprep.subr.mxu0 0.0
        %1888 = vmatpush2.msra.mxu0 0.0
        %1889 = vmatprep.subr.mxu0 0.0
        %1890 = vmatpush2.msra.mxu0 0.0
        %1891 = vmatprep.subr.mxu0 0.0
        %1892 = vmatpush2.msra.mxu0 0.0
        %1893 = vmatprep.subr.mxu0 0.0
        %1894 = vmatpush2.msra.mxu0 0.0
        %1895 = vmatprep.subr.mxu0 0.0
        %1896 = vmatpush2.msra.mxu0 0.0
        %1897 = vmatprep.subr.mxu0 0.0
        %1898 = vmatpush2.msra.mxu0 0.0
        %1899 = vmatprep.subr.mxu0 0.0
        %1900 = vmatpush2.msra.mxu0 0.0
        %1901 = vmatprep.subr.mxu0 0.0
        %1902 = vmatpush2.msra.mxu0 0.0
        %1903 = vmatprep.subr.mxu0 0.0
        %1904 = vmatpush2.msra.mxu0 0.0
        %1905 = vmatprep.subr.mxu0 0.0
        %1906 = vmatpush2.msra.mxu0 0.0
        %1907 = vmatprep.subr.mxu0 0.0
        %1908 = vmatpush2.msra.mxu0 0.0
        %1909 = vmatprep.mubr.f32.mxu0 0.0
        %1910 = vmatmul.mubr.f32.gmra.mxu0 %v1843
        %v1911 = vpop.f32.mrf.mxu0
        %v1912 = vadd.f32 0.0, %v1911
        %v1913 = vpop.f32.mrf.mxu0
        %1914 = vdwg.mxu0
        %v1915 = vadd.f32 %v1674, %v1912
        %v1916 = vld [vmem:[%s577] sm:$0xff]
        %v1917 = vadd.f32 %v1915, %v1916
        %v1918 = vsel %vm699, %v1917, 0.0
        %1919 = vadd.xlane.f32.xlu0 %v1918
        %v1920 = vpop.xlane.xlu0 %1919
        %v1921 = vrcp.pop 32.0
        %v1922 = vmul.f32 %v1920, %v1921
        %v1923 = vsub.f32 %v1917, %v1922
        %v1924 = vmul.f32 %v1923, %v1923
        %v1925 = vsel %vm699, %v1924, 0.0
        %1926 = vadd.xlane.f32.xlu0 %v1925
        %v1927 = vpop.xlane.xlu0 %1926
        %v1928 = vmul.f32 %v1927, %v1921
        %v1929 = vadd.f32 %v1928, 1e-05
        %v1930 = vrsqrt.pop %v1929
        %v1931 = vmul.f32 %v1923, %v1930
        %v1932 = vld [vmem:[%s12] sm:$0x1]
        %v1934 = vlaneseq
        %v1935 = vshrl.u32 %v1934, 7
        %v1936 = vsub.s32 0, %v1935
        %v1937 = vrot.slane %v1932, %v1936
        %v1939 = vmul.f32 %v1931, %v1937
        %v1940 = vld [vmem:[%s13] sm:$0x1]
        %v1942 = vlaneseq
        %v1943 = vshrl.u32 %v1942, 7
        %v1944 = vsub.s32 0, %v1943
        %v1945 = vrot.slane %v1940, %v1944
        %v1947 = vadd.f32 %v1939, %v1945
        %1948 = vst.msk [vmem:[%s679] sm:$0xff] %vm699, %v1947
        %s1949 = sand.u32 %s366, 1
        %s1950 = scalar_lea.sflag [#allocation4], %s1949
        %s1951 = sand.u32 %s366, 1
        %s1952 = smul.addr %s1951, 8
        %s1953 = scalar_lea.vmem [#allocation16], %s1952
        %s1954 = sand.u32 %s392, 1
        %s1955 = scalar_lea.sflag [#allocation18], %s1954
        %s1956 = sand.u32 %s392, 1
        %s1957 = smul.addr %s1956, 32
        %s1958 = scalar_lea.vmem [#allocation17], %s1957
        // Predicated region
        $region109: #{tpu_custom_call.1} parent=75 // pred_check
          %p1959 = pneg %p376
        $region110: #{tpu_custom_call.1} parent=75 // pred_check_branch
          %1961 = sbr.rel (%p1959) target = $region112
        $region111: #{tpu_custom_call.1} parent=75 // pred_region
          %s1963 = ssub.s32 128, 128
          %1964 = vsyncadd %s1950, %s1963
          %s1965 = smul.addr %s44, 128
          %s1966 = scalar_lea.hbm %s14, %s1965
          %s1968 = sshll.u32 %s1953, 4
          %s1969 = int_to_ptr.vmem [resolvable:$true] %s1968
          %1971 = dma.vmem_to_hbm [thread:$0]  %s1969, 128, %s1966, %s1950
        $region112: #{tpu_custom_call.1} parent=75 // pred_fallthru
          _
        // Predicated region
        $region113: #{tpu_custom_call.1} parent=75 // pred_check
          %p1972 = pneg %p402
        $region114: #{tpu_custom_call.1} parent=75 // pred_check_branch
          %1974 = sbr.rel (%p1972) target = $region116
        $region115: #{tpu_custom_call.1} parent=75 // pred_region
          %s1976 = ssub.s32 512, 512
          %1977 = vsyncadd %s1955, %s1976
          %s1978 = smul.addr %s44, 4
          %s1979 = smul.addr %s1978, 128
          %s1980 = scalar_lea.hbm %s15, %s1979
          %s1981 = sshll.u32 %s1958, 4
          %s1982 = int_to_ptr.vmem [resolvable:$true] %s1981
          %1987 = dma.vmem_to_hbm [thread:$0]  %s1982, 512, %s1980, %s1955, 128, 128, 8
        $region116: #{tpu_custom_call.1} parent=75 // pred_fallthru
          _
      $region76: #{tpu_custom_call.1} parent=5 // pred_fallthru
        _
      %p1988 = scmp.le.s32.totalorder 2, %s39
      // Predicated region
      $region117: #{tpu_custom_call.1} parent=5 // pred_check
        %p1989 = pneg %p1988
      $region118: #{tpu_custom_call.1} parent=5 // pred_check_branch
        %1991 = sbr.rel (%p1989) target = $region120
      $region119: #{tpu_custom_call.1} parent=5 // pred_region
        %s1992 = ssub.s32 %s39, 2
        // Predicated region
        $region121: #{tpu_custom_call.1} parent=119 // pred_check
          %p1993 = pneg %p382
        $region122: #{tpu_custom_call.1} parent=119 // pred_check_branch
          %1995 = sbr.rel (%p1993) target = $region124
        $region123: #{tpu_custom_call.1} parent=119 // pred_region
          %s1996 = sand.u32 %s367, 1
          %s1997 = scalar_lea.sflag [#allocation4], %s1996
          %s1998 = sand.u32 %s367, 1
          %s1999 = smul.addr %s1998, 8
          %s2000 = scalar_lea.vmem [#allocation16], %s1999
          %2001 = dma.done %s1997, 128
        $region124: #{tpu_custom_call.1} parent=119 // pred_fallthru
          _
        // Predicated region
        $region125: #{tpu_custom_call.1} parent=119 // pred_check
          %p2002 = pneg %p408
        $region126: #{tpu_custom_call.1} parent=119 // pred_check_branch
          %2004 = sbr.rel (%p2002) target = $region128
        $region127: #{tpu_custom_call.1} parent=119 // pred_region
          %s2005 = sand.u32 %s393, 1
          %s2006 = scalar_lea.sflag [#allocation18], %s2005
          %s2007 = sand.u32 %s393, 1
          %s2008 = smul.addr %s2007, 32
          %s2009 = scalar_lea.vmem [#allocation17], %s2008
          %2010 = dma.done %s2006, 512
        $region128: #{tpu_custom_call.1} parent=119 // pred_fallthru
          _
      $region120: #{tpu_custom_call.1} parent=5 // pred_fallthru
        _
    $region6: #{tpu_custom_call.1} parent=1 // loop_footer
      %s43 = sadd.s32 1, %s39
    $region7: #{tpu_custom_call.1} parent=1 // loop_footer_branch
      %38 = sbr.rel target = $region3
    $region8: #{tpu_custom_call.1} parent=1 // loop_exit
      _
    %2011 = vsyncpa [#allocation3], 1
    %s2012 = scalar_lea.sflag [#allocation3], 1
    %2013 = vsyncpa %s2012, 1
    %2014 = vsyncpa [#allocation6], 1
    %s2015 = scalar_lea.sflag [#allocation6], 1
    %2016 = vsyncpa %s2015, 1
    %2017 = vsyncpa [#allocation9], 1
    %s2018 = scalar_lea.sflag [#allocation9], 1
    %2019 = vsyncpa %s2018, 1
    %2020 = vsyncpa [#allocation12], 1
    %2021 = vsyncpa [#allocation15], 1
    %2022 = vsyncpa [#allocation4], 1
    %s2023 = scalar_lea.sflag [#allocation4], 1
    %2024 = vsyncpa %s2023, 1
    %2025 = vsyncpa [#allocation18], 1
    %s2026 = scalar_lea.sflag [#allocation18], 1
    %2027 = vsyncpa %s2026, 1

</llo_original>
